<compile_context>
chip_gen: v5e
topology: v5e:2x2
jax: 0.10.0
libtpu: 0.0.40
codegen_flags: <defaults>
</compile_context>

<pallas_src>
import jax
import jax.numpy as jnp
from jax import lax
from jax.experimental import pallas as pl
from jax.experimental.pallas import tpu as pltpu


def _im2col3x3(arr, h, w, c):
    """arr: (h+2, w+2, c) -> (h*w, 9*c); taps in (dh, dw) row-major order,
    matching an HWIO weight reshaped to (9*c, cout)."""
    cols = []
    for dh in range(3):
        for dw in range(3):
            cols.append(arr[dh:dh + h, dw:dw + w, :].reshape(h * w, c))
    return jnp.concatenate(cols, axis=-1)


def rec_kernel(x_ref,                      # (1, H, W, Cin)  input image, f32
               w1_ref, b1_ref,             # (9*Cin, 64) mxu dtype, (1, 64) f32
               alpha_ref,                  # (1, 1) f32      PReLU slope
               w2_ref, b2_ref,             # (9*64, 3) mxu dtype,  (1, 3) f32
               o_ref,                      # (1, H, W, 3)    output, f32
               xpad_ref):                  # VMEM scratch (H+2, W+2, Cin) f32
    _, H, W, Cin = x_ref.shape
    Cmid = w1_ref.shape[1]
    Cout = w2_ref.shape[1]
    mxu_dtype = w1_ref.dtype

    # ---- in-kernel zero padding for conv1 (padding=1) ----
    xpad_ref[...] = jnp.zeros_like(xpad_ref)
    xpad_ref[1:1 + H, 1:1 + W, :] = x_ref[0]

    # ---- conv1: 3x3 / pad 1 as a single wide MXU matmul (im2col) + bias + PReLU
    patches = _im2col3x3(xpad_ref[...], H, W, Cin)             # (H*W, 9*Cin) f32
    y1 = jnp.dot(patches.astype(mxu_dtype), w1_ref[...],
                 preferred_element_type=jnp.float32) + b1_ref[...]
    y1 = jnp.where(y1 > 0, y1, alpha_ref[...] * y1)            # PReLU, f32
    y1 = y1.reshape(H, W, Cmid)

    # ---- conv2: 3x3 / no padding ("valid") as a single matmul + bias ----
    Hi, Wi = H - 2, W - 2
    patches2 = _im2col3x3(y1, Hi, Wi, Cmid)                    # (Hi*Wi, 9*Cmid)
    y2 = jnp.dot(patches2.astype(mxu_dtype), w2_ref[...],
                 preferred_element_type=jnp.float32) + b2_ref[...]

    # ---- F.pad(..., (1,1,1,1), 'constant') then Tanh: tanh(0)==0 -> zero border
    o_ref[...] = jnp.zeros_like(o_ref)
    o_ref[0:1, 1:1 + Hi, 1:1 + Wi, :] = jnp.tanh(y2).reshape(1, Hi, Wi, Cout)


def rec_pallas(x, params, *, mxu_dtype=jnp.bfloat16):
    """x: (N, H, W, Cin) float32, NHWC layout."""
    N, H, W, Cin = x.shape
    Cmid = params["w1"].shape[-1]           # 64
    Cout = params["w2"].shape[-1]           # 3

    # Weight layout glue done wrapper-side (free at XLA level).
    w1 = params["w1"].reshape(9 * Cin, Cmid).astype(mxu_dtype)
    w2 = params["w2"].reshape(9 * Cmid, Cout).astype(mxu_dtype)
    b1 = params["b1"].reshape(1, Cmid).astype(jnp.float32)
    b2 = params["b2"].reshape(1, Cout).astype(jnp.float32)
    alpha = params["alpha"].reshape(1, 1).astype(jnp.float32)

    return pl.pallas_call(
        rec_kernel,
        out_shape=jax.ShapeDtypeStruct((N, H, W, Cout), jnp.float32),
        grid=(N,),
        in_specs=[
            pl.BlockSpec((1, H, W, Cin), lambda n: (n, 0, 0, 0)),   # x
            pl.BlockSpec((9 * Cin, Cmid), lambda n: (0, 0)),        # w1
            pl.BlockSpec((1, Cmid), lambda n: (0, 0)),              # b1
            pl.BlockSpec((1, 1), lambda n: (0, 0)),                 # alpha
            pl.BlockSpec((9 * Cmid, Cout), lambda n: (0, 0)),       # w2
            pl.BlockSpec((1, Cout), lambda n: (0, 0)),              # b2
        ],
        out_specs=pl.BlockSpec((1, H, W, Cout), lambda n: (n, 0, 0, 0)),
        scratch_shapes=[pltpu.VMEM((H + 2, W + 2, Cin), jnp.float32)],
        compiler_params=pltpu.CompilerParams(
            dimension_semantics=("parallel",)),
    )(x, w1, b1, alpha, w2, b2)


def init_params(key, in_c=64, mid_c=64, out_c=3):
    """Deterministic synthetic parameters matching rec(in_c=64)."""
    ks = jax.random.split(key, 4)
    s1 = 1.0 / (in_c * 9) ** 0.5
    s2 = 1.0 / (mid_c * 9) ** 0.5
    return {
        "w1": jax.random.normal(ks[0], (3, 3, in_c, mid_c), jnp.float32) * s1,
        "b1": jax.random.normal(ks[1], (mid_c,), jnp.float32) * s1,
        "alpha": jnp.array(0.25, jnp.float32),    # nn.PReLU() default init
        "w2": jax.random.normal(ks[2], (3, 3, mid_c, out_c), jnp.float32) * s2,
        "b2": jax.random.normal(ks[3], (out_c,), jnp.float32) * s2,
    }


def rec_ref(x, p):
    """Pure-JAX f32 reference (same math as the PyTorch forward, NHWC)."""
    y1 = lax.conv_general_dilated(
        x, p["w1"], (1, 1), "SAME",
        dimension_numbers=("NHWC", "HWIO", "NHWC"))
    y1 = y1 + p["b1"].reshape(1, 1, 1, -1)
    y1 = jnp.where(y1 > 0, y1, p["alpha"] * y1)
    y2 = lax.conv_general_dilated(
        y1, p["w2"], (1, 1), "VALID",
        dimension_numbers=("NHWC", "HWIO", "NHWC"))
    y2 = y2 + p["b2"].reshape(1, 1, 1, -1)
    y2 = jnp.pad(y2, ((0, 0), (1, 1), (1, 1), (0, 0)))   # F.pad (1,1,1,1), zeros
    return jnp.tanh(y2)


if __name__ == "__main__":
    key = jax.random.PRNGKey(0)
    kx, kp = jax.random.split(key)

    # in_c is fixed at 64 by the module (conv1 expects 64-channel features);
    # keep batch/spatial small.
    N, H, W, Cin = 2, 8, 8, 64
    x = jax.random.normal(kx, (N, H, W, Cin), jnp.float32)
    params = init_params(kp, in_c=Cin)

    ref = rec_ref(x, params)

    # f32 MXU path: tight check against the PyTorch-equivalent math.
    out_f32 = jax.block_until_ready(rec_pallas(x, params, mxu_dtype=jnp.float32))
    assert out_f32.shape == (N, H, W, 3)
    err32 = float(jnp.max(jnp.abs(out_f32 - ref)))
    assert jnp.allclose(out_f32, ref, atol=2e-3, rtol=2e-3), f"f32 max_err={err32}"

    # bf16-operand MXU path (perf default on v5e/v6e/v7x): f32 accumulation,
    # slightly looser tolerance for the operand rounding.
    out_bf16 = jax.block_until_ready(rec_pallas(x, params))
    assert out_bf16.shape == (N, H, W, 3)
    err16 = float(jnp.max(jnp.abs(out_bf16 - ref)))
    assert jnp.allclose(out_bf16, ref, atol=3e-2, rtol=3e-2), f"bf16 max_err={err16}"

    print("KERNEL_OK")
</pallas_src>

<mosaic_0001>
module attributes {stable_mosaic.version = 11 : i64} {
  func.func @rec_kernel(%arg0: i32, %arg1: memref<1x8x8x64xf32, #tpu.memory_space<vmem>>, %arg2: memref<576x64xf32, #tpu.memory_space<vmem>>, %arg3: memref<1x64xf32, #tpu.memory_space<vmem>>, %arg4: memref<1x1xf32, #tpu.memory_space<vmem>>, %arg5: memref<576x3xf32, #tpu.memory_space<vmem>>, %arg6: memref<1x3xf32, #tpu.memory_space<vmem>>, %arg7: memref<1x8x8x3xf32, #tpu.memory_space<vmem>>, %arg8: memref<10x10x64xf32, #tpu.memory_space<vmem>>) attributes {dimension_semantics = [#tpu.dimension_semantics<parallel>], iteration_bounds = array<i64: 2>, scalar_prefetch = 0 : i64, scratch_operands = 1 : i64, tpu.core_type = #tpu.core_type<tc>, window_params = [{transform_indices = @transform_0, window_bounds = array<i64: 1, 8, 8, 64>}, {pipeline_mode = #tpu.pipeline_mode<synchronous>, transform_indices = @transform_1, window_bounds = array<i64: 576, 64>}, {pipeline_mode = #tpu.pipeline_mode<synchronous>, transform_indices = @transform_2, window_bounds = array<i64: 1, 64>}, {pipeline_mode = #tpu.pipeline_mode<synchronous>, transform_indices = @transform_3, window_bounds = array<i64: 1, 1>}, {pipeline_mode = #tpu.pipeline_mode<synchronous>, transform_indices = @transform_4, window_bounds = array<i64: 576, 3>}, {pipeline_mode = #tpu.pipeline_mode<synchronous>, transform_indices = @transform_5, window_bounds = array<i64: 1, 3>}, {transform_indices = @transform_6, window_bounds = array<i64: 1, 8, 8, 3>}]} {
    %cst = arith.constant 0.000000e+00 : f32
    %0 = vector.broadcast %cst : f32 to vector<10x10x64xf32>
    %c0 = arith.constant 0 : index
    %c0_0 = arith.constant 0 : index
    %c0_1 = arith.constant 0 : index
    %1 = vector.load %arg8[%c0, %c0_0, %c0_1] : memref<10x10x64xf32, #tpu.memory_space<vmem>>, vector<10x10x64xf32>
    tpu.vector_store %arg8[%c0, %c0_0, %c0_1], %0 {strides = array<i32>} : memref<10x10x64xf32, #tpu.memory_space<vmem>>, vector<10x10x64xf32>,
    %c0_2 = arith.constant 0 : index
    %c0_3 = arith.constant 0 : index
    %c0_4 = arith.constant 0 : index
    %c0_5 = arith.constant 0 : index
    %2 = vector.load %arg1[%c0_2, %c0_3, %c0_4, %c0_5] : memref<1x8x8x64xf32, #tpu.memory_space<vmem>>, vector<1x8x8x64xf32>
    %3 = vector.shape_cast %2 : vector<1x8x8x64xf32> to vector<8x8x64xf32>
    %c1 = arith.constant 1 : index
    %c1_6 = arith.constant 1 : index
    %c0_7 = arith.constant 0 : index
    %4 = vector.load %arg8[%c1, %c1_6, %c0_7] : memref<10x10x64xf32, #tpu.memory_space<vmem>>, vector<8x8x64xf32>
    tpu.vector_store %arg8[%c1, %c1_6, %c0_7], %3 {strides = array<i32>} : memref<10x10x64xf32, #tpu.memory_space<vmem>>, vector<8x8x64xf32>,
    %c0_8 = arith.constant 0 : index
    %c0_9 = arith.constant 0 : index
    %c0_10 = arith.constant 0 : index
    %5 = vector.load %arg8[%c0_8, %c0_9, %c0_10] : memref<10x10x64xf32, #tpu.memory_space<vmem>>, vector<10x10x64xf32>
    %6 = vector.extract_strided_slice %5 {offsets = [0, 0, 0], sizes = [8, 8, 64], strides = [1, 1, 1]} : vector<10x10x64xf32> to vector<8x8x64xf32>
    %7 = vector.shape_cast %6 : vector<8x8x64xf32> to vector<64x64xf32>
    %8 = vector.extract_strided_slice %5 {offsets = [0, 1, 0], sizes = [8, 8, 64], strides = [1, 1, 1]} : vector<10x10x64xf32> to vector<8x8x64xf32>
    %9 = vector.shape_cast %8 : vector<8x8x64xf32> to vector<64x64xf32>
    %10 = vector.extract_strided_slice %5 {offsets = [0, 2, 0], sizes = [8, 8, 64], strides = [1, 1, 1]} : vector<10x10x64xf32> to vector<8x8x64xf32>
    %11 = vector.shape_cast %10 : vector<8x8x64xf32> to vector<64x64xf32>
    %12 = vector.extract_strided_slice %5 {offsets = [1, 0, 0], sizes = [8, 8, 64], strides = [1, 1, 1]} : vector<10x10x64xf32> to vector<8x8x64xf32>
    %13 = vector.shape_cast %12 : vector<8x8x64xf32> to vector<64x64xf32>
    %14 = vector.extract_strided_slice %5 {offsets = [1, 1, 0], sizes = [8, 8, 64], strides = [1, 1, 1]} : vector<10x10x64xf32> to vector<8x8x64xf32>
    %15 = vector.shape_cast %14 : vector<8x8x64xf32> to vector<64x64xf32>
    %16 = vector.extract_strided_slice %5 {offsets = [1, 2, 0], sizes = [8, 8, 64], strides = [1, 1, 1]} : vector<10x10x64xf32> to vector<8x8x64xf32>
    %17 = vector.shape_cast %16 : vector<8x8x64xf32> to vector<64x64xf32>
    %18 = vector.extract_strided_slice %5 {offsets = [2, 0, 0], sizes = [8, 8, 64], strides = [1, 1, 1]} : vector<10x10x64xf32> to vector<8x8x64xf32>
    %19 = vector.shape_cast %18 : vector<8x8x64xf32> to vector<64x64xf32>
    %20 = vector.extract_strided_slice %5 {offsets = [2, 1, 0], sizes = [8, 8, 64], strides = [1, 1, 1]} : vector<10x10x64xf32> to vector<8x8x64xf32>
    %21 = vector.shape_cast %20 : vector<8x8x64xf32> to vector<64x64xf32>
    %22 = vector.extract_strided_slice %5 {offsets = [2, 2, 0], sizes = [8, 8, 64], strides = [1, 1, 1]} : vector<10x10x64xf32> to vector<8x8x64xf32>
    %23 = vector.shape_cast %22 : vector<8x8x64xf32> to vector<64x64xf32>
    %24 = tpu.concatenate %7, %9, %11, %13, %15, %17, %19, %21, %23 in 1 : vector<64x64xf32>, vector<64x64xf32>, vector<64x64xf32>, vector<64x64xf32>, vector<64x64xf32>, vector<64x64xf32>, vector<64x64xf32>, vector<64x64xf32>, vector<64x64xf32> -> vector<64x576xf32>
    %c0_11 = arith.constant 0 : index
    %c0_12 = arith.constant 0 : index
    %25 = vector.load %arg2[%c0_11, %c0_12] : memref<576x64xf32, #tpu.memory_space<vmem>>, vector<576x64xf32>
    %cst_13 = arith.constant dense<0.000000e+00> : vector<64x64xf32>
    %26 = tpu.matmul %24, %25, %cst_13 {dimension_numbers = #tpu.dot_dimension_numbers<[1], [0], [0], [1], [0, 0, 1, 1], [], []>} : vector<64x576xf32>, vector<576x64xf32>, vector<64x64xf32> -> vector<64x64xf32>
    %c0_14 = arith.constant 0 : index
    %c0_15 = arith.constant 0 : index
    %27 = vector.load %arg3[%c0_14, %c0_15] : memref<1x64xf32, #tpu.memory_space<vmem>>, vector<1x64xf32>
    %28 = vector.broadcast %27 : vector<1x64xf32> to vector<64x64xf32>
    %29 = arith.addf %26, %28 : vector<64x64xf32>
    %cst_16 = arith.constant 0.000000e+00 : f32
    %30 = vector.broadcast %cst_16 : f32 to vector<64x64xf32>
    %31 = arith.cmpf ogt, %29, %30 : vector<64x64xf32>
    %c0_17 = arith.constant 0 : index
    %c0_18 = arith.constant 0 : index
    %32 = vector.load %arg4[%c0_17, %c0_18] : memref<1x1xf32, #tpu.memory_space<vmem>>, vector<1x1xf32>
    %33 = vector.broadcast %32 : vector<1x1xf32> to vector<64x64xf32>
    %34 = arith.mulf %33, %29 : vector<64x64xf32>
    %35 = arith.select %31, %29, %34 : vector<64x64xi1>, vector<64x64xf32>
    %36 = vector.shape_cast %35 : vector<64x64xf32> to vector<8x8x64xf32>
    %37 = vector.extract_strided_slice %36 {offsets = [0, 0, 0], sizes = [6, 6, 64], strides = [1, 1, 1]} : vector<8x8x64xf32> to vector<6x6x64xf32>
    %38 = vector.shape_cast %37 : vector<6x6x64xf32> to vector<36x64xf32>
    %39 = vector.extract_strided_slice %36 {offsets = [0, 1, 0], sizes = [6, 6, 64], strides = [1, 1, 1]} : vector<8x8x64xf32> to vector<6x6x64xf32>
    %40 = vector.shape_cast %39 : vector<6x6x64xf32> to vector<36x64xf32>
    %41 = vector.extract_strided_slice %36 {offsets = [0, 2, 0], sizes = [6, 6, 64], strides = [1, 1, 1]} : vector<8x8x64xf32> to vector<6x6x64xf32>
    %42 = vector.shape_cast %41 : vector<6x6x64xf32> to vector<36x64xf32>
    %43 = vector.extract_strided_slice %36 {offsets = [1, 0, 0], sizes = [6, 6, 64], strides = [1, 1, 1]} : vector<8x8x64xf32> to vector<6x6x64xf32>
    %44 = vector.shape_cast %43 : vector<6x6x64xf32> to vector<36x64xf32>
    %45 = vector.extract_strided_slice %36 {offsets = [1, 1, 0], sizes = [6, 6, 64], strides = [1, 1, 1]} : vector<8x8x64xf32> to vector<6x6x64xf32>
    %46 = vector.shape_cast %45 : vector<6x6x64xf32> to vector<36x64xf32>
    %47 = vector.extract_strided_slice %36 {offsets = [1, 2, 0], sizes = [6, 6, 64], strides = [1, 1, 1]} : vector<8x8x64xf32> to vector<6x6x64xf32>
    %48 = vector.shape_cast %47 : vector<6x6x64xf32> to vector<36x64xf32>
    %49 = vector.extract_strided_slice %36 {offsets = [2, 0, 0], sizes = [6, 6, 64], strides = [1, 1, 1]} : vector<8x8x64xf32> to vector<6x6x64xf32>
    %50 = vector.shape_cast %49 : vector<6x6x64xf32> to vector<36x64xf32>
    %51 = vector.extract_strided_slice %36 {offsets = [2, 1, 0], sizes = [6, 6, 64], strides = [1, 1, 1]} : vector<8x8x64xf32> to vector<6x6x64xf32>
    %52 = vector.shape_cast %51 : vector<6x6x64xf32> to vector<36x64xf32>
    %53 = vector.extract_strided_slice %36 {offsets = [2, 2, 0], sizes = [6, 6, 64], strides = [1, 1, 1]} : vector<8x8x64xf32> to vector<6x6x64xf32>
    %54 = vector.shape_cast %53 : vector<6x6x64xf32> to vector<36x64xf32>
    %55 = tpu.concatenate %38, %40, %42, %44, %46, %48, %50, %52, %54 in 1 : vector<36x64xf32>, vector<36x64xf32>, vector<36x64xf32>, vector<36x64xf32>, vector<36x64xf32>, vector<36x64xf32>, vector<36x64xf32>, vector<36x64xf32>, vector<36x64xf32> -> vector<36x576xf32>
    %c0_19 = arith.constant 0 : index
    %c0_20 = arith.constant 0 : index
    %56 = vector.load %arg5[%c0_19, %c0_20] : memref<576x3xf32, #tpu.memory_space<vmem>>, vector<576x3xf32>
    %cst_21 = arith.constant dense<0.000000e+00> : vector<36x3xf32>
    %57 = tpu.matmul %55, %56, %cst_21 {dimension_numbers = #tpu.dot_dimension_numbers<[1], [0], [0], [1], [0, 0, 1, 1], [], []>} : vector<36x576xf32>, vector<576x3xf32>, vector<36x3xf32> -> vector<36x3xf32>
    %c0_22 = arith.constant 0 : index
    %c0_23 = arith.constant 0 : index
    %58 = vector.load %arg6[%c0_22, %c0_23] : memref<1x3xf32, #tpu.memory_space<vmem>>, vector<1x3xf32>
    %59 = vector.broadcast %58 : vector<1x3xf32> to vector<36x3xf32>
    %60 = arith.addf %57, %59 : vector<36x3xf32>
    %cst_24 = arith.constant 0.000000e+00 : f32
    %61 = vector.broadcast %cst_24 : f32 to vector<1x8x8x3xf32>
    %c0_25 = arith.constant 0 : index
    %c0_26 = arith.constant 0 : index
    %c0_27 = arith.constant 0 : index
    %c0_28 = arith.constant 0 : index
    %62 = vector.load %arg7[%c0_25, %c0_26, %c0_27, %c0_28] : memref<1x8x8x3xf32, #tpu.memory_space<vmem>>, vector<1x8x8x3xf32>
    tpu.vector_store %arg7[%c0_25, %c0_26, %c0_27, %c0_28], %61 {strides = array<i32>} : memref<1x8x8x3xf32, #tpu.memory_space<vmem>>, vector<1x8x8x3xf32>,
    %63 = math.tanh %60 : vector<36x3xf32>
    %64 = vector.shape_cast %63 : vector<36x3xf32> to vector<1x6x6x3xf32>
    %c0_29 = arith.constant 0 : index
    %c1_30 = arith.constant 1 : index
    %c1_31 = arith.constant 1 : index
    %c0_32 = arith.constant 0 : index
    %65 = vector.load %arg7[%c0_29, %c1_30, %c1_31, %c0_32] : memref<1x8x8x3xf32, #tpu.memory_space<vmem>>, vector<1x6x6x3xf32>
    tpu.vector_store %arg7[%c0_29, %c1_30, %c1_31, %c0_32], %64 {strides = array<i32>} : memref<1x8x8x3xf32, #tpu.memory_space<vmem>>, vector<1x6x6x3xf32>,
    return
  }
  func.func @transform_0(%arg0: i32) -> (i32, i32, i32, i32) {
    %c0_i32 = arith.constant 0 : i32
    %c0_i32_0 = arith.constant 0 : i32
    %c0_i32_1 = arith.constant 0 : i32
    %c0_i32_2 = arith.constant 0 : i32
    return %arg0, %c0_i32, %c0_i32_0, %c0_i32_1 : i32, i32, i32, i32
  }
  func.func @transform_1(%arg0: i32) -> (i32, i32) {
    %c0_i32 = arith.constant 0 : i32
    %c0_i32_0 = arith.constant 0 : i32
    %c0_i32_1 = arith.constant 0 : i32
    return %c0_i32, %c0_i32_0 : i32, i32
  }
  func.func @transform_2(%arg0: i32) -> (i32, i32) {
    %c0_i32 = arith.constant 0 : i32
    %c0_i32_0 = arith.constant 0 : i32
    %c0_i32_1 = arith.constant 0 : i32
    return %c0_i32, %c0_i32_0 : i32, i32
  }
  func.func @transform_3(%arg0: i32) -> (i32, i32) {
    %c0_i32 = arith.constant 0 : i32
    %c0_i32_0 = arith.constant 0 : i32
    %c0_i32_1 = arith.constant 0 : i32
    return %c0_i32, %c0_i32_0 : i32, i32
  }
  func.func @transform_4(%arg0: i32) -> (i32, i32) {
    %c0_i32 = arith.constant 0 : i32
    %c0_i32_0 = arith.constant 0 : i32
    %c0_i32_1 = arith.constant 0 : i32
    return %c0_i32, %c0_i32_0 : i32, i32
  }
  func.func @transform_5(%arg0: i32) -> (i32, i32) {
    %c0_i32 = arith.constant 0 : i32
    %c0_i32_0 = arith.constant 0 : i32
    %c0_i32_1 = arith.constant 0 : i32
    return %c0_i32, %c0_i32_0 : i32, i32
  }
  func.func @transform_6(%arg0: i32) -> (i32, i32, i32, i32) {
    %c0_i32 = arith.constant 0 : i32
    %c0_i32_0 = arith.constant 0 : i32
    %c0_i32_1 = arith.constant 0 : i32
    %c0_i32_2 = arith.constant 0 : i32
    return %arg0, %c0_i32, %c0_i32_0, %c0_i32_1 : i32, i32, i32, i32
  }
}

</mosaic_0001>

<llo_original>
// kernel: tpu_custom_call.1
$region0: #{tpu_custom_call.1}
  #allocation0 [shape = 'u32[]', space=smem, size = 0x4, offset = 0x4, fixed_abs, tag = 'smem constant byte address 0x4 - core index']
  #allocation1 [shape = 'u32[72,128]{1,0:T(1,128)}', space=vmem, size = 0x9000, scoped, tag = 'internal scratch']
  #allocation2 [shape = 'f32[10,10,64]{2,1,0:T(8,128)}', space=vmem, size = 0x14000, scoped, tag = 'scratch operand']
  #allocation3 [shape = 'f32[1,1]{1,0:T(1,128)S(1)}', space=vmem, size = 0x200, scoped, tag = 'scoped memory for tpu_custom_call.1']
  %s0 = inlined_call_operand.vmem [shape: f32[2,8,8,64], index: 0, kind: input, shape index: {}]
  %s1 = inlined_call_operand.vmem [shape: f32[576,64], index: 1, kind: input, shape index: {}]
  %s2 = inlined_call_operand.vmem [shape: f32[1,64], index: 2, kind: input, shape index: {}]
  %s3 = inlined_call_operand.<no memory space> [shape: f32[1,1], index: 3, kind: input, shape index: {}]
  %s4 = inlined_call_operand.vmem [shape: f32[576,3], index: 4, kind: input, shape index: {}]
  %s5 = inlined_call_operand.vmem [shape: f32[1,3], index: 5, kind: input, shape index: {}]
  %s6 = inlined_call_operand.vmem [shape: f32[2,8,8,3], index: 6, kind: output, shape index: {}]
  %s7 = sld [smem:[#allocation0]]
  $region57: #{tpu_custom_call.1} parent=0
    _
  %s9 = ssub.s32 1, %s7
  %s10 = scalar_select 0, %s9, %s7
  %v11 = vstv %s3
  %12 = vst [vmem:[#allocation3] sm:$0x1] %v11
  loop: start=0, step=1, limit=4
  $region2: #{tpu_custom_call.1} parent=0 // loop_pre_header
    _
  $region3: #{tpu_custom_call.1} parent=0 // loop_header
    %s14 = sphi 0, %s18
    %p15 = scmp.ge.s32.totalorder %s14, 4
    %s24 = sphi 0, %s26
    %s27 = sphi 0, %s24
    %s28 = sphi 0, %s27
    %s44 = sphi 0, %s28
    %s48 = sphi 0, %s48
    %s50 = sphi 0, %s48
    %s51 = sphi 0, %s50
    %s65 = sphi 0, %s51
    %s69 = sphi 0, %s69
    %s71 = sphi 0, %s69
    %s72 = sphi 0, %s71
    %s86 = sphi 0, %s72
    %s90 = sphi 0, %s90
    %s92 = sphi 0, %s90
    %s93 = sphi 0, %s92
    %s107 = sphi 0, %s93
    %s111 = sphi 0, %s111
    %s113 = sphi 0, %s111
    %s114 = sphi 0, %s113
    %s128 = sphi 0, %s114
    %s132 = sphi 0, %s132
    %s134 = sphi 0, %s132
    %s135 = sphi 0, %s134
    %s149 = sphi 0, %s135
    %s155 = sphi 0, %s157
    %s158 = sphi 0, %s155
    %s159 = sphi 0, %s158
    %s175 = sphi 0, %s159
  $region4: #{tpu_custom_call.1} parent=0 // loop_header_branch
    %17 = sbr.rel (%p15) target = $region8
  $region5: #{tpu_custom_call.1} parent=0 // loop_body
    %s19 = ssub.s32 %s14, 1
    %s20 = ssub.s32 %s14, 2
    %s21 = sadd.s32 %s14, 1
    %s22 = ssub.s32 %s14, %s21
    %p23 = scmp.eq.s32.totalorder %s22, 0
    %s25 = sadd.s32 %s24, 1
    %s26 = scalar_select %p23, %s24, %s25
    %p29 = pneg %p23
    %p30 = scmp.eq.s32.totalorder %s14, 1
    %p31 = por %p29, %p30
    %p32 = scmp.ne.s32.totalorder %s24, %s27
    %p33 = scmp.eq.s32.totalorder %s14, 0
    %p34 = por %p32, %p33
    %p35 = scmp.ne.s32.totalorder %s24, %s27
    %p36 = scmp.eq.s32.totalorder %s19, 1
    %p37 = por %p35, %p36
    %p38 = scmp.ne.s32.totalorder %s27, %s28
    %p39 = scmp.eq.s32.totalorder %s19, 0
    %p40 = por %p38, %p39
    %p41 = scmp.ne.s32.totalorder %s27, %s28
    %p42 = scmp.eq.s32.totalorder %s20, 1
    %p43 = por %p41, %p42
    %p45 = scmp.ne.s32.totalorder %s28, %s44
    %p46 = scmp.eq.s32.totalorder %s20, 0
    %p47 = por %p45, %p46
    %s49 = sadd.s32 %s48, 1
    %p52 = scmp.eq.s32.totalorder %s14, 1
    %p53 = scmp.ne.s32.totalorder %s48, %s50
    %p54 = scmp.eq.s32.totalorder %s14, 0
    %p55 = por %p53, %p54
    %p56 = scmp.ne.s32.totalorder %s48, %s50
    %p57 = scmp.eq.s32.totalorder %s19, 1
    %p58 = por %p56, %p57
    %p59 = scmp.ne.s32.totalorder %s50, %s51
    %p60 = scmp.eq.s32.totalorder %s19, 0
    %p61 = por %p59, %p60
    %p62 = scmp.ne.s32.totalorder %s50, %s51
    %p63 = scmp.eq.s32.totalorder %s20, 1
    %p64 = por %p62, %p63
    %p66 = scmp.ne.s32.totalorder %s51, %s65
    %p67 = scmp.eq.s32.totalorder %s20, 0
    %p68 = por %p66, %p67
    %s70 = sadd.s32 %s69, 1
    %p73 = scmp.eq.s32.totalorder %s14, 1
    %p74 = scmp.ne.s32.totalorder %s69, %s71
    %p75 = scmp.eq.s32.totalorder %s14, 0
    %p76 = por %p74, %p75
    %p77 = scmp.ne.s32.totalorder %s69, %s71
    %p78 = scmp.eq.s32.totalorder %s19, 1
    %p79 = por %p77, %p78
    %p80 = scmp.ne.s32.totalorder %s71, %s72
    %p81 = scmp.eq.s32.totalorder %s19, 0
    %p82 = por %p80, %p81
    %p83 = scmp.ne.s32.totalorder %s71, %s72
    %p84 = scmp.eq.s32.totalorder %s20, 1
    %p85 = por %p83, %p84
    %p87 = scmp.ne.s32.totalorder %s72, %s86
    %p88 = scmp.eq.s32.totalorder %s20, 0
    %p89 = por %p87, %p88
    %s91 = sadd.s32 %s90, 1
    %p94 = scmp.eq.s32.totalorder %s14, 1
    %p95 = scmp.ne.s32.totalorder %s90, %s92
    %p96 = scmp.eq.s32.totalorder %s14, 0
    %p97 = por %p95, %p96
    %p98 = scmp.ne.s32.totalorder %s90, %s92
    %p99 = scmp.eq.s32.totalorder %s19, 1
    %p100 = por %p98, %p99
    %p101 = scmp.ne.s32.totalorder %s92, %s93
    %p102 = scmp.eq.s32.totalorder %s19, 0
    %p103 = por %p101, %p102
    %p104 = scmp.ne.s32.totalorder %s92, %s93
    %p105 = scmp.eq.s32.totalorder %s20, 1
    %p106 = por %p104, %p105
    %p108 = scmp.ne.s32.totalorder %s93, %s107
    %p109 = scmp.eq.s32.totalorder %s20, 0
    %p110 = por %p108, %p109
    %s112 = sadd.s32 %s111, 1
    %p115 = scmp.eq.s32.totalorder %s14, 1
    %p116 = scmp.ne.s32.totalorder %s111, %s113
    %p117 = scmp.eq.s32.totalorder %s14, 0
    %p118 = por %p116, %p117
    %p119 = scmp.ne.s32.totalorder %s111, %s113
    %p120 = scmp.eq.s32.totalorder %s19, 1
    %p121 = por %p119, %p120
    %p122 = scmp.ne.s32.totalorder %s113, %s114
    %p123 = scmp.eq.s32.totalorder %s19, 0
    %p124 = por %p122, %p123
    %p125 = scmp.ne.s32.totalorder %s113, %s114
    %p126 = scmp.eq.s32.totalorder %s20, 1
    %p127 = por %p125, %p126
    %p129 = scmp.ne.s32.totalorder %s114, %s128
    %p130 = scmp.eq.s32.totalorder %s20, 0
    %p131 = por %p129, %p130
    %s133 = sadd.s32 %s132, 1
    %p136 = scmp.eq.s32.totalorder %s14, 1
    %p137 = scmp.ne.s32.totalorder %s132, %s134
    %p138 = scmp.eq.s32.totalorder %s14, 0
    %p139 = por %p137, %p138
    %p140 = scmp.ne.s32.totalorder %s132, %s134
    %p141 = scmp.eq.s32.totalorder %s19, 1
    %p142 = por %p140, %p141
    %p143 = scmp.ne.s32.totalorder %s134, %s135
    %p144 = scmp.eq.s32.totalorder %s19, 0
    %p145 = por %p143, %p144
    %p146 = scmp.ne.s32.totalorder %s134, %s135
    %p147 = scmp.eq.s32.totalorder %s20, 1
    %p148 = por %p146, %p147
    %p150 = scmp.ne.s32.totalorder %s135, %s149
    %p151 = scmp.eq.s32.totalorder %s20, 0
    %p152 = por %p150, %p151
    %s153 = ssub.s32 %s14, %s21
    %p154 = scmp.eq.s32.totalorder %s153, 0
    %s156 = sadd.s32 %s155, 1
    %s157 = scalar_select %p154, %s155, %s156
    %p160 = pneg %p154
    %p161 = scmp.eq.s32.totalorder %s14, 1
    %p162 = por %p160, %p161
    %p163 = scmp.ne.s32.totalorder %s155, %s158
    %p164 = scmp.eq.s32.totalorder %s14, 0
    %p165 = por %p163, %p164
    %p166 = scmp.ne.s32.totalorder %s155, %s158
    %p167 = scmp.eq.s32.totalorder %s19, 1
    %p168 = por %p166, %p167
    %p169 = scmp.ne.s32.totalorder %s158, %s159
    %p170 = scmp.eq.s32.totalorder %s19, 0
    %p171 = por %p169, %p170
    %p172 = scmp.ne.s32.totalorder %s158, %s159
    %p173 = scmp.eq.s32.totalorder %s20, 1
    %p174 = por %p172, %p173
    %p176 = scmp.ne.s32.totalorder %s159, %s175
    %p177 = scmp.eq.s32.totalorder %s20, 0
    %p178 = por %p176, %p177
    %p179 = scmp.le.s32.totalorder 1, %s14
    %p180 = scmp.lt.s32.totalorder %s14, 3
    %p181 = pnand %p179, %p180
    %p182 = pneg %p181
    // Predicated region
    $region9: #{tpu_custom_call.1} parent=5 // pred_check
      _
    $region10: #{tpu_custom_call.1} parent=5 // pred_check_branch
      %184 = sbr.rel (%p181) target = $region12
    $region11: #{tpu_custom_call.1} parent=5 // pred_region
      %s185 = ssub.s32 %s14, 1
      // Predicated region
      $region13: #{tpu_custom_call.1} parent=11 // pred_check
        %p186 = pneg %p61
      $region14: #{tpu_custom_call.1} parent=11 // pred_check_branch
        %188 = sbr.rel (%p186) target = $region16
      $region15: #{tpu_custom_call.1} parent=11 // pred_region
        _
      $region16: #{tpu_custom_call.1} parent=11 // pred_fallthru
        _
      // Predicated region
      $region17: #{tpu_custom_call.1} parent=11 // pred_check
        %p189 = pneg %p82
      $region18: #{tpu_custom_call.1} parent=11 // pred_check_branch
        %191 = sbr.rel (%p189) target = $region20
      $region19: #{tpu_custom_call.1} parent=11 // pred_region
        _
      $region20: #{tpu_custom_call.1} parent=11 // pred_fallthru
        _
      // Predicated region
      $region21: #{tpu_custom_call.1} parent=11 // pred_check
        %p192 = pneg %p103
      $region22: #{tpu_custom_call.1} parent=11 // pred_check_branch
        %194 = sbr.rel (%p192) target = $region24
      $region23: #{tpu_custom_call.1} parent=11 // pred_region
        _
      $region24: #{tpu_custom_call.1} parent=11 // pred_fallthru
        _
      // Predicated region
      $region25: #{tpu_custom_call.1} parent=11 // pred_check
        %p195 = pneg %p124
      $region26: #{tpu_custom_call.1} parent=11 // pred_check_branch
        %197 = sbr.rel (%p195) target = $region28
      $region27: #{tpu_custom_call.1} parent=11 // pred_region
        _
      $region28: #{tpu_custom_call.1} parent=11 // pred_fallthru
        _
      // Predicated region
      $region29: #{tpu_custom_call.1} parent=11 // pred_check
        %p198 = pneg %p145
      $region30: #{tpu_custom_call.1} parent=11 // pred_check_branch
        %200 = sbr.rel (%p198) target = $region32
      $region31: #{tpu_custom_call.1} parent=11 // pred_region
        _
      $region32: #{tpu_custom_call.1} parent=11 // pred_fallthru
        _
    $region12: #{tpu_custom_call.1} parent=5 // pred_fallthru
      _
    %p201 = scmp.lt.s32.totalorder %s14, 2
    // Predicated region
    $region33: #{tpu_custom_call.1} parent=5 // pred_check
      %p202 = pneg %p201
    $region34: #{tpu_custom_call.1} parent=5 // pred_check_branch
      %204 = sbr.rel (%p202) target = $region36
    $region35: #{tpu_custom_call.1} parent=5 // pred_region
      // Predicated region
      $region37: #{tpu_custom_call.1} parent=35 // pred_check
        %p205 = pneg %p34
      $region38: #{tpu_custom_call.1} parent=35 // pred_check_branch
        %207 = sbr.rel (%p205) target = $region40
      $region39: #{tpu_custom_call.1} parent=35 // pred_region
        %p208 = scmp.lt.s32.totalorder %s14, 1
        %s209 = scalar_select %p208, %s14, 1
        %s210 = smul.addr %s209, 8
        %s211 = smul.addr %s210, 8
        %s212 = scalar_lea.vmem %s0, %s211
      $region40: #{tpu_custom_call.1} parent=35 // pred_fallthru
        _
    $region36: #{tpu_custom_call.1} parent=5 // pred_fallthru
      _
    %p213 = scmp.le.s32.totalorder 1, %s14
    %p214 = scmp.lt.s32.totalorder %s14, 3
    %p215 = pnand %p213, %p214
    %p216 = pneg %p215
    // Predicated region
    $region41: #{tpu_custom_call.1} parent=5 // pred_check
      _
    $region42: #{tpu_custom_call.1} parent=5 // pred_check_branch
      %218 = sbr.rel (%p215) target = $region44
    $region43: #{tpu_custom_call.1} parent=5 // pred_region
      %s219 = ssub.s32 %s14, 1
      %p220 = scmp.lt.s32.totalorder %s19, 1
      %s221 = scalar_select %p220, %s19, 1
      %s222 = smul.addr %s221, 8
      %s223 = smul.addr %s222, 8
      %s224 = scalar_lea.vmem %s0, %s223
      %p225 = pneg %p40
      %p226 = pneg %p37
      %p227 = pneg %p61
      %p228 = pneg %p58
      %p229 = pneg %p82
      %p230 = pneg %p79
      %p231 = pneg %p103
      %p232 = pneg %p100
      %p233 = pneg %p124
      %p234 = pneg %p121
      %p235 = pneg %p145
      %p236 = pneg %p142
      %p237 = pneg %p171
      %p238 = pneg %p168
      %p239 = scmp.lt.s32.totalorder %s19, 1
      %s240 = scalar_select %p239, %s19, 1
      %s241 = smul.addr %s240, 8
      %s242 = smul.addr %s241, 8
      %s243 = scalar_lea.vmem %s6, %s242
      %p244 = scmp.lt.s32.totalorder %s19, 1
      %s245 = scalar_select %p244, %s19, 1
      %s246 = smul.addr %s245, 8
      %s247 = smul.addr %s246, 8
      %s248 = scalar_lea.vmem %s0, %s247
      %p249 = scmp.lt.s32.totalorder %s19, 1
      %s250 = scalar_select %p249, %s19, 1
      %s251 = smul.addr %s250, 8
      %s252 = smul.addr %s251, 8
      %s253 = scalar_lea.vmem %s6, %s252
      %vm254 = vcmask 523264
      %255 = vst.msk [vmem:[#allocation2] sm:$0xff] %vm254, 0.0
      %vm256 = vcmask 517120
      %257 = vst.msk [vmem:[#allocation2 + $0x8] sm:$0x3] %vm256, 0.0
      %258 = vst.msk [vmem:[#allocation2 + $0x10] sm:$0xff] %vm254, 0.0
      %259 = vst.msk [vmem:[#allocation2 + $0x18] sm:$0x3] %vm256, 0.0
      %260 = vst.msk [vmem:[#allocation2 + $0x20] sm:$0xff] %vm254, 0.0
      %261 = vst.msk [vmem:[#allocation2 + $0x28] sm:$0x3] %vm256, 0.0
      %262 = vst.msk [vmem:[#allocation2 + $0x30] sm:$0xff] %vm254, 0.0
      %263 = vst.msk [vmem:[#allocation2 + $0x38] sm:$0x3] %vm256, 0.0
      %264 = vst.msk [vmem:[#allocation2 + $0x40] sm:$0xff] %vm254, 0.0
      %265 = vst.msk [vmem:[#allocation2 + $0x48] sm:$0x3] %vm256, 0.0
      %266 = vst.msk [vmem:[#allocation2 + $0x50] sm:$0xff] %vm254, 0.0
      %267 = vst.msk [vmem:[#allocation2 + $0x58] sm:$0x3] %vm256, 0.0
      %268 = vst.msk [vmem:[#allocation2 + $0x60] sm:$0xff] %vm254, 0.0
      %269 = vst.msk [vmem:[#allocation2 + $0x68] sm:$0x3] %vm256, 0.0
      %270 = vst.msk [vmem:[#allocation2 + $0x70] sm:$0xff] %vm254, 0.0
      %271 = vst.msk [vmem:[#allocation2 + $0x78] sm:$0x3] %vm256, 0.0
      %272 = vst.msk [vmem:[#allocation2 + $0x80] sm:$0xff] %vm254, 0.0
      %273 = vst.msk [vmem:[#allocation2 + $0x88] sm:$0x3] %vm256, 0.0
      %274 = vst.msk [vmem:[#allocation2 + $0x90] sm:$0xff] %vm254, 0.0
      %275 = vst.msk [vmem:[#allocation2 + $0x98] sm:$0x3] %vm256, 0.0
      %v276 = vld [vmem:[%s248] sm:$0xff]
      %v277 = vld [vmem:[%s248 + $0x8] sm:$0xff]
      %v278 = vld [vmem:[%s248 + $0x10] sm:$0xff]
      %v279 = vld [vmem:[%s248 + $0x18] sm:$0xff]
      %v280 = vld [vmem:[%s248 + $0x20] sm:$0xff]
      %v281 = vld [vmem:[%s248 + $0x28] sm:$0xff]
      %v282 = vld [vmem:[%s248 + $0x30] sm:$0xff]
      %v283 = vld [vmem:[%s248 + $0x38] sm:$0xff]
      %s284 = scalar_lea.vmem [#allocation2], 16
      %285 = vst.msk [vmem:[%s284 + $0x1] sm:$0xff] %vm254, %v276
      %286 = vst.msk [vmem:[%s284 + $0x11] sm:$0xff] %vm254, %v277
      %287 = vst.msk [vmem:[%s284 + $0x21] sm:$0xff] %vm254, %v278
      %288 = vst.msk [vmem:[%s284 + $0x31] sm:$0xff] %vm254, %v279
      %289 = vst.msk [vmem:[%s284 + $0x41] sm:$0xff] %vm254, %v280
      %290 = vst.msk [vmem:[%s284 + $0x51] sm:$0xff] %vm254, %v281
      %291 = vst.msk [vmem:[%s284 + $0x61] sm:$0xff] %vm254, %v282
      %292 = vst.msk [vmem:[%s284 + $0x71] sm:$0xff] %vm254, %v283
      %v293 = vld [vmem:[#allocation2] sm:$0xff]
      %v294 = vld [vmem:[#allocation2 + $0x8] sm:$0x3]
      %v295 = vld [vmem:[#allocation2 + $0x10] sm:$0xff]
      %v296 = vld [vmem:[#allocation2 + $0x18] sm:$0x3]
      %v297 = vld [vmem:[#allocation2 + $0x20] sm:$0xff]
      %v298 = vld [vmem:[#allocation2 + $0x28] sm:$0x3]
      %v299 = vld [vmem:[#allocation2 + $0x30] sm:$0xff]
      %v300 = vld [vmem:[#allocation2 + $0x38] sm:$0x3]
      %v301 = vld [vmem:[#allocation2 + $0x40] sm:$0xff]
      %v302 = vld [vmem:[#allocation2 + $0x48] sm:$0x3]
      %v303 = vld [vmem:[#allocation2 + $0x50] sm:$0xff]
      %v304 = vld [vmem:[#allocation2 + $0x58] sm:$0x3]
      %v305 = vld [vmem:[#allocation2 + $0x60] sm:$0xff]
      %v306 = vld [vmem:[#allocation2 + $0x68] sm:$0x3]
      %v307 = vld [vmem:[#allocation2 + $0x70] sm:$0xff]
      %v308 = vld [vmem:[#allocation2 + $0x78] sm:$0x3]
      %v309 = vld [vmem:[#allocation2 + $0x80] sm:$0xff]
      %v310 = vld [vmem:[#allocation2 + $0x88] sm:$0x3]
      %v311 = vld [vmem:[#allocation2 + $0x90] sm:$0xff]
      %v312 = vld [vmem:[#allocation2 + $0x98] sm:$0x3]
      %vm329 = vcmask 1046528
      %v330 = vrot.slane %v293, 1
      %v331 = vrot.slane %v294, 1
      %v332 = vsel %vm329, %v330, %v331
      %v333 = vrot.slane %v295, 1
      %v334 = vrot.slane %v296, 1
      %v335 = vsel %vm329, %v333, %v334
      %v336 = vrot.slane %v297, 1
      %v337 = vrot.slane %v298, 1
      %v338 = vsel %vm329, %v336, %v337
      %v339 = vrot.slane %v299, 1
      %v340 = vrot.slane %v300, 1
      %v341 = vsel %vm329, %v339, %v340
      %v342 = vrot.slane %v301, 1
      %v343 = vrot.slane %v302, 1
      %v344 = vsel %vm329, %v342, %v343
      %v345 = vrot.slane %v303, 1
      %v346 = vrot.slane %v304, 1
      %v347 = vsel %vm329, %v345, %v346
      %v348 = vrot.slane %v305, 1
      %v349 = vrot.slane %v306, 1
      %v350 = vsel %vm329, %v348, %v349
      %v351 = vrot.slane %v307, 1
      %v352 = vrot.slane %v308, 1
      %v353 = vsel %vm329, %v351, %v352
      %vm354 = vcmask 1045504
      %v355 = vrot.slane %v293, 2
      %v356 = vrot.slane %v294, 2
      %v357 = vsel %vm354, %v355, %v356
      %v358 = vrot.slane %v295, 2
      %v359 = vrot.slane %v296, 2
      %v360 = vsel %vm354, %v358, %v359
      %v361 = vrot.slane %v297, 2
      %v362 = vrot.slane %v298, 2
      %v363 = vsel %vm354, %v361, %v362
      %v364 = vrot.slane %v299, 2
      %v365 = vrot.slane %v300, 2
      %v366 = vsel %vm354, %v364, %v365
      %v367 = vrot.slane %v301, 2
      %v368 = vrot.slane %v302, 2
      %v369 = vsel %vm354, %v367, %v368
      %v370 = vrot.slane %v303, 2
      %v371 = vrot.slane %v304, 2
      %v372 = vsel %vm354, %v370, %v371
      %v373 = vrot.slane %v305, 2
      %v374 = vrot.slane %v306, 2
      %v375 = vsel %vm354, %v373, %v374
      %v376 = vrot.slane %v307, 2
      %v377 = vrot.slane %v308, 2
      %v378 = vsel %vm354, %v376, %v377
      %v389 = vrot.slane %v309, 1
      %v390 = vrot.slane %v310, 1
      %v391 = vsel %vm329, %v389, %v390
      %v400 = vrot.slane %v309, 2
      %v401 = vrot.slane %v310, 2
      %v402 = vsel %vm354, %v400, %v401
      %v405 = vrot.slane %v311, 1
      %v406 = vrot.slane %v312, 1
      %v407 = vsel %vm329, %v405, %v406
      %v408 = vrot.slane %v311, 2
      %v409 = vrot.slane %v312, 2
      %v410 = vsel %vm354, %v408, %v409
      %411 = vrot.lane.b32.xlu0 %v332, 64
      %v412 = vpop.permute.xlu0 %411
      %413 = vrot.lane.b32.xlu0 %v335, 64
      %v414 = vpop.permute.xlu0 %413
      %415 = vrot.lane.b32.xlu0 %v338, 64
      %v416 = vpop.permute.xlu0 %415
      %417 = vrot.lane.b32.xlu0 %v341, 64
      %v418 = vpop.permute.xlu0 %417
      %419 = vrot.lane.b32.xlu0 %v344, 64
      %v420 = vpop.permute.xlu0 %419
      %421 = vrot.lane.b32.xlu0 %v347, 64
      %v422 = vpop.permute.xlu0 %421
      %423 = vrot.lane.b32.xlu0 %v350, 64
      %v424 = vpop.permute.xlu0 %423
      %425 = vrot.lane.b32.xlu0 %v353, 64
      %v426 = vpop.permute.xlu0 %425
      %435 = vrot.lane.b32.xlu0 %v295, 64
      %v436 = vpop.permute.xlu0 %435
      %437 = vrot.lane.b32.xlu0 %v297, 64
      %v438 = vpop.permute.xlu0 %437
      %439 = vrot.lane.b32.xlu0 %v299, 64
      %v440 = vpop.permute.xlu0 %439
      %441 = vrot.lane.b32.xlu0 %v301, 64
      %v442 = vpop.permute.xlu0 %441
      %443 = vrot.lane.b32.xlu0 %v303, 64
      %v444 = vpop.permute.xlu0 %443
      %445 = vrot.lane.b32.xlu0 %v305, 64
      %v446 = vpop.permute.xlu0 %445
      %447 = vrot.lane.b32.xlu0 %v307, 64
      %v448 = vpop.permute.xlu0 %447
      %449 = vrot.lane.b32.xlu0 %v309, 64
      %v450 = vpop.permute.xlu0 %449
      %459 = vrot.lane.b32.xlu0 %v360, 64
      %v460 = vpop.permute.xlu0 %459
      %461 = vrot.lane.b32.xlu0 %v363, 64
      %v462 = vpop.permute.xlu0 %461
      %463 = vrot.lane.b32.xlu0 %v366, 64
      %v464 = vpop.permute.xlu0 %463
      %465 = vrot.lane.b32.xlu0 %v369, 64
      %v466 = vpop.permute.xlu0 %465
      %467 = vrot.lane.b32.xlu0 %v372, 64
      %v468 = vpop.permute.xlu0 %467
      %469 = vrot.lane.b32.xlu0 %v375, 64
      %v470 = vpop.permute.xlu0 %469
      %471 = vrot.lane.b32.xlu0 %v378, 64
      %v472 = vpop.permute.xlu0 %471
      %473 = vrot.lane.b32.xlu0 %v402, 64
      %v474 = vpop.permute.xlu0 %473
      %483 = vrot.lane.b32.xlu0 %v391, 64
      %v484 = vpop.permute.xlu0 %483
      %485 = vrot.lane.b32.xlu0 %v407, 64
      %v486 = vpop.permute.xlu0 %485
      %v489 = vsel %vm254, %v293, %v412
      %v490 = vsel %vm254, %v295, %v414
      %v491 = vsel %vm254, %v297, %v416
      %v492 = vsel %vm254, %v299, %v418
      %v493 = vsel %vm254, %v301, %v420
      %v494 = vsel %vm254, %v303, %v422
      %v495 = vsel %vm254, %v305, %v424
      %v496 = vsel %vm254, %v307, %v426
      %v497 = vsel %vm254, %v357, %v436
      %v498 = vsel %vm254, %v360, %v438
      %v499 = vsel %vm254, %v363, %v440
      %v500 = vsel %vm254, %v366, %v442
      %v501 = vsel %vm254, %v369, %v444
      %v502 = vsel %vm254, %v372, %v446
      %v503 = vsel %vm254, %v375, %v448
      %v504 = vsel %vm254, %v378, %v450
      %v505 = vsel %vm254, %v335, %v460
      %v506 = vsel %vm254, %v338, %v462
      %v507 = vsel %vm254, %v341, %v464
      %v508 = vsel %vm254, %v344, %v466
      %v509 = vsel %vm254, %v347, %v468
      %v510 = vsel %vm254, %v350, %v470
      %v511 = vsel %vm254, %v353, %v472
      %v512 = vsel %vm254, %v391, %v474
      %v513 = vsel %vm254, %v309, %v484
      %v514 = vsel %vm254, %v311, %v486
      %v515 = vld [vmem:[%s1] sm:$0xff]
      %v516 = vld [vmem:[%s1 + $0x8] sm:$0xff]
      %v517 = vld [vmem:[%s1 + $0x10] sm:$0xff]
      %v518 = vld [vmem:[%s1 + $0x18] sm:$0xff]
      %v519 = vld [vmem:[%s1 + $0x20] sm:$0xff]
      %v520 = vld [vmem:[%s1 + $0x28] sm:$0xff]
      %v521 = vld [vmem:[%s1 + $0x30] sm:$0xff]
      %v522 = vld [vmem:[%s1 + $0x38] sm:$0xff]
      %v523 = vld [vmem:[%s1 + $0x40] sm:$0xff]
      %v524 = vld [vmem:[%s1 + $0x48] sm:$0xff]
      %v525 = vld [vmem:[%s1 + $0x50] sm:$0xff]
      %v526 = vld [vmem:[%s1 + $0x58] sm:$0xff]
      %v527 = vld [vmem:[%s1 + $0x60] sm:$0xff]
      %v528 = vld [vmem:[%s1 + $0x68] sm:$0xff]
      %v529 = vld [vmem:[%s1 + $0x70] sm:$0xff]
      %v530 = vld [vmem:[%s1 + $0x78] sm:$0xff]
      %v531 = vld [vmem:[%s1 + $0x80] sm:$0xff]
      %v532 = vld [vmem:[%s1 + $0x88] sm:$0xff]
      %v533 = vld [vmem:[%s1 + $0x90] sm:$0xff]
      %v534 = vld [vmem:[%s1 + $0x98] sm:$0xff]
      %v535 = vld [vmem:[%s1 + $0xa0] sm:$0xff]
      %v536 = vld [vmem:[%s1 + $0xa8] sm:$0xff]
      %v537 = vld [vmem:[%s1 + $0xb0] sm:$0xff]
      %v538 = vld [vmem:[%s1 + $0xb8] sm:$0xff]
      %v539 = vld [vmem:[%s1 + $0xc0] sm:$0xff]
      %v540 = vld [vmem:[%s1 + $0xc8] sm:$0xff]
      %v541 = vld [vmem:[%s1 + $0xd0] sm:$0xff]
      %v542 = vld [vmem:[%s1 + $0xd8] sm:$0xff]
      %v543 = vld [vmem:[%s1 + $0xe0] sm:$0xff]
      %v544 = vld [vmem:[%s1 + $0xe8] sm:$0xff]
      %v545 = vld [vmem:[%s1 + $0xf0] sm:$0xff]
      %v546 = vld [vmem:[%s1 + $0xf8] sm:$0xff]
      %v547 = vld [vmem:[%s1 + $0x100] sm:$0xff]
      %v548 = vld [vmem:[%s1 + $0x108] sm:$0xff]
      %v549 = vld [vmem:[%s1 + $0x110] sm:$0xff]
      %v550 = vld [vmem:[%s1 + $0x118] sm:$0xff]
      %v551 = vld [vmem:[%s1 + $0x120] sm:$0xff]
      %v552 = vld [vmem:[%s1 + $0x128] sm:$0xff]
      %v553 = vld [vmem:[%s1 + $0x130] sm:$0xff]
      %v554 = vld [vmem:[%s1 + $0x138] sm:$0xff]
      %v555 = vld [vmem:[%s1 + $0x140] sm:$0xff]
      %v556 = vld [vmem:[%s1 + $0x148] sm:$0xff]
      %v557 = vld [vmem:[%s1 + $0x150] sm:$0xff]
      %v558 = vld [vmem:[%s1 + $0x158] sm:$0xff]
      %v559 = vld [vmem:[%s1 + $0x160] sm:$0xff]
      %v560 = vld [vmem:[%s1 + $0x168] sm:$0xff]
      %v561 = vld [vmem:[%s1 + $0x170] sm:$0xff]
      %v562 = vld [vmem:[%s1 + $0x178] sm:$0xff]
      %v563 = vld [vmem:[%s1 + $0x180] sm:$0xff]
      %v564 = vld [vmem:[%s1 + $0x188] sm:$0xff]
      %v565 = vld [vmem:[%s1 + $0x190] sm:$0xff]
      %v566 = vld [vmem:[%s1 + $0x198] sm:$0xff]
      %v567 = vld [vmem:[%s1 + $0x1a0] sm:$0xff]
      %v568 = vld [vmem:[%s1 + $0x1a8] sm:$0xff]
      %v569 = vld [vmem:[%s1 + $0x1b0] sm:$0xff]
      %v570 = vld [vmem:[%s1 + $0x1b8] sm:$0xff]
      %v571 = vld [vmem:[%s1 + $0x1c0] sm:$0xff]
      %v572 = vld [vmem:[%s1 + $0x1c8] sm:$0xff]
      %v573 = vld [vmem:[%s1 + $0x1d0] sm:$0xff]
      %v574 = vld [vmem:[%s1 + $0x1d8] sm:$0xff]
      %v575 = vld [vmem:[%s1 + $0x1e0] sm:$0xff]
      %v576 = vld [vmem:[%s1 + $0x1e8] sm:$0xff]
      %v577 = vld [vmem:[%s1 + $0x1f0] sm:$0xff]
      %v578 = vld [vmem:[%s1 + $0x1f8] sm:$0xff]
      %v579 = vld [vmem:[%s1 + $0x200] sm:$0xff]
      %v580 = vld [vmem:[%s1 + $0x208] sm:$0xff]
      %v581 = vld [vmem:[%s1 + $0x210] sm:$0xff]
      %v582 = vld [vmem:[%s1 + $0x218] sm:$0xff]
      %v583 = vld [vmem:[%s1 + $0x220] sm:$0xff]
      %v584 = vld [vmem:[%s1 + $0x228] sm:$0xff]
      %v585 = vld [vmem:[%s1 + $0x230] sm:$0xff]
      %v586 = vld [vmem:[%s1 + $0x238] sm:$0xff]
      %v587 = vld [vmem:[%s2] sm:$0x1]
      %v589 = vperm.slane %v587, 0
      %v591 = vsel %vm254, %v363, 0
      %v593 = vsel %vm254, %v366, 0
      %v595 = vsel %vm254, %v369, 0
      %v597 = vsel %vm254, %v372, 0
      %v599 = vsel %vm254, %v375, 0
      %v601 = vsel %vm254, %v378, 0
      %v603 = vsel %vm254, %v402, 0
      %v605 = vsel %vm254, %v410, 0
      %607 = vmatpush.msra.mxu0 %v530
      %608 = vmatpush.msra.mxu0 %v529
      %609 = vmatpush.msra.mxu0 %v528
      %610 = vmatpush.msra.mxu0 %v527
      %611 = vmatpush.msra.mxu0 %v526
      %612 = vmatpush.msra.mxu0 %v525
      %613 = vmatpush.msra.mxu0 %v524
      %614 = vmatpush.msra.mxu0 %v523
      %615 = vmatpush.msra.mxu0 %v522
      %616 = vmatpush.msra.mxu0 %v521
      %617 = vmatpush.msra.mxu0 %v520
      %618 = vmatpush.msra.mxu0 %v519
      %619 = vmatpush.msra.mxu0 %v518
      %620 = vmatpush.msra.mxu0 %v517
      %621 = vmatpush.msra.mxu0 %v516
      %622 = vmatpush.msra.mxu0 %v515
      %623 = vmatmul.f32.gmra.mxu0 %v489
      %v624 = vpop.f32.mrf.mxu0
      %v625 = vadd.f32 %v589, %v624
      %626 = vmatmul.f32.gmra.mxu0 %v490
      %v627 = vpop.f32.mrf.mxu0
      %v628 = vadd.f32 %v589, %v627
      %629 = vmatmul.f32.gmra.mxu0 %v491
      %v630 = vpop.f32.mrf.mxu0
      %v631 = vadd.f32 %v589, %v630
      %632 = vmatmul.f32.gmra.mxu0 %v492
      %v633 = vpop.f32.mrf.mxu0
      %v634 = vadd.f32 %v589, %v633
      %635 = vmatmul.f32.gmra.mxu0 %v493
      %v636 = vpop.f32.mrf.mxu0
      %v637 = vadd.f32 %v589, %v636
      %638 = vmatmul.f32.gmra.mxu0 %v494
      %v639 = vpop.f32.mrf.mxu0
      %v640 = vadd.f32 %v589, %v639
      %641 = vmatmul.f32.gmra.mxu0 %v495
      %v642 = vpop.f32.mrf.mxu0
      %v643 = vadd.f32 %v589, %v642
      %644 = vmatmul.f32.gmra.mxu0 %v496
      %v645 = vpop.f32.mrf.mxu0
      %v646 = vadd.f32 %v589, %v645
      %647 = vdwg.mxu0
      %648 = vmatpush.msra.mxu0 %v546
      %649 = vmatpush.msra.mxu0 %v545
      %650 = vmatpush.msra.mxu0 %v544
      %651 = vmatpush.msra.mxu0 %v543
      %652 = vmatpush.msra.mxu0 %v542
      %653 = vmatpush.msra.mxu0 %v541
      %654 = vmatpush.msra.mxu0 %v540
      %655 = vmatpush.msra.mxu0 %v539
      %656 = vmatpush.msra.mxu0 %v538
      %657 = vmatpush.msra.mxu0 %v537
      %658 = vmatpush.msra.mxu0 %v536
      %659 = vmatpush.msra.mxu0 %v535
      %660 = vmatpush.msra.mxu0 %v534
      %661 = vmatpush.msra.mxu0 %v533
      %662 = vmatpush.msra.mxu0 %v532
      %663 = vmatpush.msra.mxu0 %v531
      %664 = vmatmul.f32.gmra.mxu0 %v497
      %v665 = vpop.f32.mrf.mxu0
      %v666 = vadd.f32 %v625, %v665
      %667 = vmatmul.f32.gmra.mxu0 %v498
      %v668 = vpop.f32.mrf.mxu0
      %v669 = vadd.f32 %v628, %v668
      %670 = vmatmul.f32.gmra.mxu0 %v499
      %v671 = vpop.f32.mrf.mxu0
      %v672 = vadd.f32 %v631, %v671
      %673 = vmatmul.f32.gmra.mxu0 %v500
      %v674 = vpop.f32.mrf.mxu0
      %v675 = vadd.f32 %v634, %v674
      %676 = vmatmul.f32.gmra.mxu0 %v501
      %v677 = vpop.f32.mrf.mxu0
      %v678 = vadd.f32 %v637, %v677
      %679 = vmatmul.f32.gmra.mxu0 %v502
      %v680 = vpop.f32.mrf.mxu0
      %v681 = vadd.f32 %v640, %v680
      %682 = vmatmul.f32.gmra.mxu0 %v503
      %v683 = vpop.f32.mrf.mxu0
      %v684 = vadd.f32 %v643, %v683
      %685 = vmatmul.f32.gmra.mxu0 %v504
      %v686 = vpop.f32.mrf.mxu0
      %v687 = vadd.f32 %v646, %v686
      %688 = vdwg.mxu0
      %689 = vmatpush.msra.mxu0 %v562
      %690 = vmatpush.msra.mxu0 %v561
      %691 = vmatpush.msra.mxu0 %v560
      %692 = vmatpush.msra.mxu0 %v559
      %693 = vmatpush.msra.mxu0 %v558
      %694 = vmatpush.msra.mxu0 %v557
      %695 = vmatpush.msra.mxu0 %v556
      %696 = vmatpush.msra.mxu0 %v555
      %697 = vmatpush.msra.mxu0 %v554
      %698 = vmatpush.msra.mxu0 %v553
      %699 = vmatpush.msra.mxu0 %v552
      %700 = vmatpush.msra.mxu0 %v551
      %701 = vmatpush.msra.mxu0 %v550
      %702 = vmatpush.msra.mxu0 %v549
      %703 = vmatpush.msra.mxu0 %v548
      %704 = vmatpush.msra.mxu0 %v547
      %705 = vmatmul.f32.gmra.mxu0 %v505
      %v706 = vpop.f32.mrf.mxu0
      %v707 = vadd.f32 %v666, %v706
      %708 = vmatmul.f32.gmra.mxu0 %v506
      %v709 = vpop.f32.mrf.mxu0
      %v710 = vadd.f32 %v669, %v709
      %711 = vmatmul.f32.gmra.mxu0 %v507
      %v712 = vpop.f32.mrf.mxu0
      %v713 = vadd.f32 %v672, %v712
      %714 = vmatmul.f32.gmra.mxu0 %v508
      %v715 = vpop.f32.mrf.mxu0
      %v716 = vadd.f32 %v675, %v715
      %717 = vmatmul.f32.gmra.mxu0 %v509
      %v718 = vpop.f32.mrf.mxu0
      %v719 = vadd.f32 %v678, %v718
      %720 = vmatmul.f32.gmra.mxu0 %v510
      %v721 = vpop.f32.mrf.mxu0
      %v722 = vadd.f32 %v681, %v721
      %723 = vmatmul.f32.gmra.mxu0 %v511
      %v724 = vpop.f32.mrf.mxu0
      %v725 = vadd.f32 %v684, %v724
      %726 = vmatmul.f32.gmra.mxu0 %v512
      %v727 = vpop.f32.mrf.mxu0
      %v728 = vadd.f32 %v687, %v727
      %729 = vdwg.mxu0
      %730 = vmatpush.msra.mxu0 %v578
      %731 = vmatpush.msra.mxu0 %v577
      %732 = vmatpush.msra.mxu0 %v576
      %733 = vmatpush.msra.mxu0 %v575
      %734 = vmatpush.msra.mxu0 %v574
      %735 = vmatpush.msra.mxu0 %v573
      %736 = vmatpush.msra.mxu0 %v572
      %737 = vmatpush.msra.mxu0 %v571
      %738 = vmatpush.msra.mxu0 %v570
      %739 = vmatpush.msra.mxu0 %v569
      %740 = vmatpush.msra.mxu0 %v568
      %741 = vmatpush.msra.mxu0 %v567
      %742 = vmatpush.msra.mxu0 %v566
      %743 = vmatpush.msra.mxu0 %v565
      %744 = vmatpush.msra.mxu0 %v564
      %745 = vmatpush.msra.mxu0 %v563
      %746 = vmatmul.f32.gmra.mxu0 %v491
      %v747 = vpop.f32.mrf.mxu0
      %v748 = vadd.f32 %v707, %v747
      %749 = vmatmul.f32.gmra.mxu0 %v492
      %v750 = vpop.f32.mrf.mxu0
      %v751 = vadd.f32 %v710, %v750
      %752 = vmatmul.f32.gmra.mxu0 %v493
      %v753 = vpop.f32.mrf.mxu0
      %v754 = vadd.f32 %v713, %v753
      %755 = vmatmul.f32.gmra.mxu0 %v494
      %v756 = vpop.f32.mrf.mxu0
      %v757 = vadd.f32 %v716, %v756
      %758 = vmatmul.f32.gmra.mxu0 %v495
      %v759 = vpop.f32.mrf.mxu0
      %v760 = vadd.f32 %v719, %v759
      %761 = vmatmul.f32.gmra.mxu0 %v496
      %v762 = vpop.f32.mrf.mxu0
      %v763 = vadd.f32 %v722, %v762
      %764 = vmatmul.f32.gmra.mxu0 %v513
      %v765 = vpop.f32.mrf.mxu0
      %v766 = vadd.f32 %v725, %v765
      %767 = vmatmul.f32.gmra.mxu0 %v514
      %v768 = vpop.f32.mrf.mxu0
      %v769 = vadd.f32 %v728, %v768
      %770 = vdwg.mxu0
      %771 = vmatpush.msra.mxu0 0.0
      %772 = vmatpush.msra.mxu0 0.0
      %773 = vmatpush.msra.mxu0 0.0
      %774 = vmatpush.msra.mxu0 0.0
      %775 = vmatpush.msra.mxu0 0.0
      %776 = vmatpush.msra.mxu0 0.0
      %777 = vmatpush.msra.mxu0 0.0
      %778 = vmatpush.msra.mxu0 0.0
      %779 = vmatpush.msra.mxu0 %v586
      %780 = vmatpush.msra.mxu0 %v585
      %781 = vmatpush.msra.mxu0 %v584
      %782 = vmatpush.msra.mxu0 %v583
      %783 = vmatpush.msra.mxu0 %v582
      %784 = vmatpush.msra.mxu0 %v581
      %785 = vmatpush.msra.mxu0 %v580
      %786 = vmatpush.msra.mxu0 %v579
      %787 = vmatmul.f32.gmra.mxu0 %v591
      %v788 = vpop.f32.mrf.mxu0
      %v789 = vadd.f32 %v748, %v788
      %790 = vmatmul.f32.gmra.mxu0 %v593
      %v791 = vpop.f32.mrf.mxu0
      %v792 = vadd.f32 %v751, %v791
      %793 = vmatmul.f32.gmra.mxu0 %v595
      %v794 = vpop.f32.mrf.mxu0
      %v795 = vadd.f32 %v754, %v794
      %796 = vmatmul.f32.gmra.mxu0 %v597
      %v797 = vpop.f32.mrf.mxu0
      %v798 = vadd.f32 %v757, %v797
      %799 = vmatmul.f32.gmra.mxu0 %v599
      %v800 = vpop.f32.mrf.mxu0
      %v801 = vadd.f32 %v760, %v800
      %802 = vmatmul.f32.gmra.mxu0 %v601
      %v803 = vpop.f32.mrf.mxu0
      %v804 = vadd.f32 %v763, %v803
      %805 = vmatmul.f32.gmra.mxu0 %v603
      %v806 = vpop.f32.mrf.mxu0
      %v807 = vadd.f32 %v766, %v806
      %808 = vmatmul.f32.gmra.mxu0 %v605
      %v809 = vpop.f32.mrf.mxu0
      %v810 = vadd.f32 %v769, %v809
      %811 = vdwg.mxu0
      %vm812 = vcmp.gt.f32.partialorder %v789, 0.0
      %vm813 = vcmp.gt.f32.partialorder %v792, 0.0
      %vm814 = vcmp.gt.f32.partialorder %v795, 0.0
      %vm815 = vcmp.gt.f32.partialorder %v798, 0.0
      %vm816 = vcmp.gt.f32.partialorder %v801, 0.0
      %vm817 = vcmp.gt.f32.partialorder %v804, 0.0
      %vm818 = vcmp.gt.f32.partialorder %v807, 0.0
      %vm819 = vcmp.gt.f32.partialorder %v810, 0.0
      %v820 = vld [vmem:[#allocation3] sm:$0x1]
      %v822 = vperm.slane %v820, 0
      %823 = vset.pattern.permute.xlu0 0
      %824 = vperm.xlu0 %823, %v822
      %v825 = vpop.permute.xlu0 %824
      %v827 = vmul.f32 %v825, %v789
      %v828 = vmul.f32 %v825, %v792
      %v829 = vmul.f32 %v825, %v795
      %v830 = vmul.f32 %v825, %v798
      %v831 = vmul.f32 %v825, %v801
      %v832 = vmul.f32 %v825, %v804
      %v833 = vmul.f32 %v825, %v807
      %v834 = vmul.f32 %v825, %v810
      %v835 = vsel %vm812, %v789, %v827
      %v836 = vsel %vm813, %v792, %v828
      %v837 = vsel %vm814, %v795, %v829
      %v838 = vsel %vm815, %v798, %v830
      %v839 = vsel %vm816, %v801, %v831
      %v840 = vsel %vm817, %v804, %v832
      %v841 = vsel %vm818, %v807, %v833
      %v842 = vsel %vm819, %v810, %v834
      %v849 = vrot.slane %v835, 2
      %v850 = vrot.slane %v835, 4
      %v851 = vrot.slane %v836, 2
      %v852 = vrot.slane %v836, 4
      %v853 = vrot.slane %v837, 2
      %v854 = vrot.slane %v837, 4
      %v855 = vrot.slane %v838, 2
      %v856 = vrot.slane %v838, 4
      %v857 = vrot.slane %v839, 2
      %v858 = vrot.slane %v839, 4
      %v859 = vrot.slane %v840, 2
      %v860 = vrot.slane %v840, 4
      %v861 = vrot.slane %v835, 6
      %v862 = vrot.slane %v836, 6
      %v863 = vrot.slane %v837, 6
      %v864 = vrot.slane %v838, 6
      %v865 = vrot.slane %v839, 6
      %v866 = vrot.slane %v840, 6
      %vm867 = vcmask 1040384
      %vm868 = vcmask 1042434
      %vm869 = vmor %vm867, %vm868
      %vm870 = vcmask 1044484
      %vm871 = vmor %vm869, %vm870
      %vm872 = vcmask 1046534
      %vm873 = vmor %vm871, %vm872
      %v874 = vrot.slane %v835, 7
      %v875 = vrot.slane %v874, 2
      %v876 = vrot.slane %v849, 7
      %v877 = vsel %vm873, %v875, %v876
      %v878 = vrot.slane %v876, 2
      %v879 = vrot.slane %v850, 7
      %v880 = vsel %vm873, %v878, %v879
      %v881 = vrot.slane %v879, 2
      %v882 = vrot.slane %v861, 7
      %v883 = vsel %vm873, %v881, %v882
      %v884 = vrot.slane %v836, 7
      %v885 = vrot.slane %v884, 2
      %v886 = vrot.slane %v851, 7
      %v887 = vsel %vm873, %v885, %v886
      %v888 = vrot.slane %v886, 2
      %v889 = vrot.slane %v852, 7
      %v890 = vsel %vm873, %v888, %v889
      %v891 = vrot.slane %v889, 2
      %v892 = vrot.slane %v862, 7
      %v893 = vsel %vm873, %v891, %v892
      %v894 = vrot.slane %v837, 7
      %v895 = vrot.slane %v894, 2
      %v896 = vrot.slane %v853, 7
      %v897 = vsel %vm873, %v895, %v896
      %v898 = vrot.slane %v896, 2
      %v899 = vrot.slane %v854, 7
      %v900 = vsel %vm873, %v898, %v899
      %v901 = vrot.slane %v899, 2
      %v902 = vrot.slane %v863, 7
      %v903 = vsel %vm873, %v901, %v902
      %v904 = vrot.slane %v838, 7
      %v905 = vrot.slane %v904, 2
      %v906 = vrot.slane %v855, 7
      %v907 = vsel %vm873, %v905, %v906
      %v908 = vrot.slane %v906, 2
      %v909 = vrot.slane %v856, 7
      %v910 = vsel %vm873, %v908, %v909
      %v911 = vrot.slane %v909, 2
      %v912 = vrot.slane %v864, 7
      %v913 = vsel %vm873, %v911, %v912
      %v914 = vrot.slane %v839, 7
      %v915 = vrot.slane %v914, 2
      %v916 = vrot.slane %v857, 7
      %v917 = vsel %vm873, %v915, %v916
      %v918 = vrot.slane %v916, 2
      %v919 = vrot.slane %v858, 7
      %v920 = vsel %vm873, %v918, %v919
      %v921 = vrot.slane %v919, 2
      %v922 = vrot.slane %v865, 7
      %v923 = vsel %vm873, %v921, %v922
      %v924 = vrot.slane %v840, 7
      %v925 = vrot.slane %v924, 2
      %v926 = vrot.slane %v859, 7
      %v927 = vsel %vm873, %v925, %v926
      %v928 = vrot.slane %v926, 2
      %v929 = vrot.slane %v860, 7
      %v930 = vsel %vm873, %v928, %v929
      %v931 = vrot.slane %v929, 2
      %v932 = vrot.slane %v866, 7
      %v933 = vsel %vm873, %v931, %v932
      %934 = vst.sshfl [vmem:[#allocation1] sm:$0xff pattern:$0x73625140] %v835
      %s935 = scalar_lea.vmem [#allocation1], 1
      %v936 = vld [vmem:[%s935] ss:$4 sm:$0xff]
      %s937 = scalar_lea.vmem [#allocation1], 2
      %v938 = vld [vmem:[%s937] ss:$4 sm:$0xff]
      %s939 = scalar_lea.vmem [#allocation1], 3
      %v940 = vld [vmem:[%s939] ss:$4 sm:$0xff]
      %941 = vst.sshfl [vmem:[#allocation1 + $0x20] sm:$0xff pattern:$0x73625140] %v836
      %s942 = scalar_lea.vmem [#allocation1], 33
      %v943 = vld [vmem:[%s942] ss:$4 sm:$0xff]
      %s944 = scalar_lea.vmem [#allocation1], 34
      %v945 = vld [vmem:[%s944] ss:$4 sm:$0xff]
      %s946 = scalar_lea.vmem [#allocation1], 35
      %v947 = vld [vmem:[%s946] ss:$4 sm:$0xff]
      %948 = vst.sshfl [vmem:[#allocation1] sm:$0xff pattern:$0x73625140] %v837
      %v949 = vld [vmem:[%s935] ss:$4 sm:$0xff]
      %v950 = vld [vmem:[%s937] ss:$4 sm:$0xff]
      %v951 = vld [vmem:[%s939] ss:$4 sm:$0xff]
      %952 = vst.sshfl [vmem:[#allocation1 + $0x20] sm:$0xff pattern:$0x73625140] %v838
      %v953 = vld [vmem:[%s942] ss:$4 sm:$0xff]
      %v954 = vld [vmem:[%s944] ss:$4 sm:$0xff]
      %v955 = vld [vmem:[%s946] ss:$4 sm:$0xff]
      %956 = vst.sshfl [vmem:[#allocation1] sm:$0xff pattern:$0x73625140] %v839
      %v957 = vld [vmem:[%s935] ss:$4 sm:$0xff]
      %v958 = vld [vmem:[%s937] ss:$4 sm:$0xff]
      %v959 = vld [vmem:[%s939] ss:$4 sm:$0xff]
      %960 = vst.sshfl [vmem:[#allocation1 + $0x20] sm:$0xff pattern:$0x73625140] %v840
      %v961 = vld [vmem:[%s942] ss:$4 sm:$0xff]
      %v962 = vld [vmem:[%s944] ss:$4 sm:$0xff]
      %v963 = vld [vmem:[%s946] ss:$4 sm:$0xff]
      %v965 = vrot.slane %v841, 2
      %v966 = vrot.slane %v841, 4
      %v967 = vrot.slane %v841, 6
      %v968 = vrot.slane %v841, 7
      %v969 = vrot.slane %v968, 2
      %v970 = vrot.slane %v965, 7
      %v971 = vsel %vm873, %v969, %v970
      %v972 = vrot.slane %v970, 2
      %v973 = vrot.slane %v966, 7
      %v974 = vsel %vm873, %v972, %v973
      %v975 = vrot.slane %v973, 2
      %v976 = vrot.slane %v967, 7
      %v977 = vsel %vm873, %v975, %v976
      %978 = vst.sshfl [vmem:[#allocation1] sm:$0xff pattern:$0x73625140] %v836
      %s979 = scalar_lea.vmem [#allocation1], 1
      %v980 = vld [vmem:[%s979] ss:$4 sm:$0xff]
      %s981 = scalar_lea.vmem [#allocation1], 2
      %v982 = vld [vmem:[%s981] ss:$4 sm:$0xff]
      %s983 = scalar_lea.vmem [#allocation1], 3
      %v984 = vld [vmem:[%s983] ss:$4 sm:$0xff]
      %985 = vst.sshfl [vmem:[#allocation1 + $0x20] sm:$0xff pattern:$0x73625140] %v837
      %s986 = scalar_lea.vmem [#allocation1], 33
      %v987 = vld [vmem:[%s986] ss:$4 sm:$0xff]
      %s988 = scalar_lea.vmem [#allocation1], 34
      %v989 = vld [vmem:[%s988] ss:$4 sm:$0xff]
      %s990 = scalar_lea.vmem [#allocation1], 35
      %v991 = vld [vmem:[%s990] ss:$4 sm:$0xff]
      %992 = vst.sshfl [vmem:[#allocation1] sm:$0xff pattern:$0x73625140] %v838
      %v993 = vld [vmem:[%s979] ss:$4 sm:$0xff]
      %v994 = vld [vmem:[%s981] ss:$4 sm:$0xff]
      %v995 = vld [vmem:[%s983] ss:$4 sm:$0xff]
      %996 = vst.sshfl [vmem:[#allocation1 + $0x20] sm:$0xff pattern:$0x73625140] %v839
      %v997 = vld [vmem:[%s986] ss:$4 sm:$0xff]
      %v998 = vld [vmem:[%s988] ss:$4 sm:$0xff]
      %v999 = vld [vmem:[%s990] ss:$4 sm:$0xff]
      %1000 = vst.sshfl [vmem:[#allocation1] sm:$0xff pattern:$0x73625140] %v840
      %v1001 = vld [vmem:[%s979] ss:$4 sm:$0xff]
      %v1002 = vld [vmem:[%s981] ss:$4 sm:$0xff]
      %v1003 = vld [vmem:[%s983] ss:$4 sm:$0xff]
      %1004 = vst.sshfl [vmem:[#allocation1 + $0x20] sm:$0xff pattern:$0x73625140] %v841
      %v1005 = vld [vmem:[%s986] ss:$4 sm:$0xff]
      %v1006 = vld [vmem:[%s988] ss:$4 sm:$0xff]
      %v1007 = vld [vmem:[%s990] ss:$4 sm:$0xff]
      %v1009 = vrot.slane %v842, 2
      %v1010 = vrot.slane %v842, 4
      %v1011 = vrot.slane %v842, 6
      %v1012 = vrot.slane %v842, 7
      %v1013 = vrot.slane %v1012, 2
      %v1014 = vrot.slane %v1009, 7
      %v1015 = vsel %vm873, %v1013, %v1014
      %v1016 = vrot.slane %v1014, 2
      %v1017 = vrot.slane %v1010, 7
      %v1018 = vsel %vm873, %v1016, %v1017
      %v1019 = vrot.slane %v1017, 2
      %v1020 = vrot.slane %v1011, 7
      %v1021 = vsel %vm873, %v1019, %v1020
      %1022 = vst.sshfl [vmem:[#allocation1] sm:$0xff pattern:$0x73625140] %v837
      %s1023 = scalar_lea.vmem [#allocation1], 1
      %v1024 = vld [vmem:[%s1023] ss:$4 sm:$0xff]
      %s1025 = scalar_lea.vmem [#allocation1], 2
      %v1026 = vld [vmem:[%s1025] ss:$4 sm:$0xff]
      %s1027 = scalar_lea.vmem [#allocation1], 3
      %v1028 = vld [vmem:[%s1027] ss:$4 sm:$0xff]
      %1029 = vst.sshfl [vmem:[#allocation1 + $0x20] sm:$0xff pattern:$0x73625140] %v838
      %s1030 = scalar_lea.vmem [#allocation1], 33
      %v1031 = vld [vmem:[%s1030] ss:$4 sm:$0xff]
      %s1032 = scalar_lea.vmem [#allocation1], 34
      %v1033 = vld [vmem:[%s1032] ss:$4 sm:$0xff]
      %s1034 = scalar_lea.vmem [#allocation1], 35
      %v1035 = vld [vmem:[%s1034] ss:$4 sm:$0xff]
      %1036 = vst.sshfl [vmem:[#allocation1] sm:$0xff pattern:$0x73625140] %v839
      %v1037 = vld [vmem:[%s1023] ss:$4 sm:$0xff]
      %v1038 = vld [vmem:[%s1025] ss:$4 sm:$0xff]
      %v1039 = vld [vmem:[%s1027] ss:$4 sm:$0xff]
      %1040 = vst.sshfl [vmem:[#allocation1 + $0x20] sm:$0xff pattern:$0x73625140] %v840
      %v1041 = vld [vmem:[%s1030] ss:$4 sm:$0xff]
      %v1042 = vld [vmem:[%s1032] ss:$4 sm:$0xff]
      %v1043 = vld [vmem:[%s1034] ss:$4 sm:$0xff]
      %1044 = vst.sshfl [vmem:[#allocation1] sm:$0xff pattern:$0x73625140] %v841
      %v1045 = vld [vmem:[%s1023] ss:$4 sm:$0xff]
      %v1046 = vld [vmem:[%s1025] ss:$4 sm:$0xff]
      %v1047 = vld [vmem:[%s1027] ss:$4 sm:$0xff]
      %1048 = vst.sshfl [vmem:[#allocation1 + $0x20] sm:$0xff pattern:$0x73625140] %v842
      %v1049 = vld [vmem:[%s1030] ss:$4 sm:$0xff]
      %v1050 = vld [vmem:[%s1032] ss:$4 sm:$0xff]
      %v1051 = vld [vmem:[%s1034] ss:$4 sm:$0xff]
      %1052 = vst [vmem:[#allocation1] ss:$4 sm:$0xff] %v835
      %s1053 = scalar_lea.vmem [#allocation1], 1
      %1054 = vst [vmem:[%s1053] ss:$4 sm:$0xff] %v849
      %s1055 = scalar_lea.vmem [#allocation1], 2
      %1056 = vst [vmem:[%s1055] ss:$4 sm:$0xff] %v850
      %s1057 = scalar_lea.vmem [#allocation1], 3
      %1058 = vst [vmem:[%s1057] ss:$4 sm:$0xff] %v836
      %s1059 = scalar_lea.vmem [#allocation1], 32
      %1060 = vst [vmem:[%s1059] ss:$4 sm:$0xff] %v851
      %s1061 = scalar_lea.vmem [#allocation1], 33
      %1062 = vst [vmem:[%s1061] ss:$4 sm:$0xff] %v852
      %s1063 = scalar_lea.vmem [#allocation1], 34
      %1064 = vst [vmem:[%s1063] ss:$4 sm:$0xff] %v837
      %s1065 = scalar_lea.vmem [#allocation1], 35
      %1066 = vst [vmem:[%s1065] ss:$4 sm:$0xff] %v853
      %v1067 = vld.sshfl [vmem:[#allocation1] sm:$0xff pattern:$0x73625140]
      %v1068 = vld.sshfl [vmem:[#allocation1 + $0x20] sm:$0xff pattern:$0x73625140]
      %1069 = vst [vmem:[#allocation1] ss:$4 sm:$0xff] %v854
      %1070 = vst [vmem:[%s1053] ss:$4 sm:$0xff] %v838
      %1071 = vst [vmem:[%s1055] ss:$4 sm:$0xff] %v855
      %1072 = vst [vmem:[%s1057] ss:$4 sm:$0xff] %v856
      %1073 = vst [vmem:[%s1059] ss:$4 sm:$0xff] %v839
      %1074 = vst [vmem:[%s1061] ss:$4 sm:$0xff] %v857
      %1075 = vst [vmem:[%s1063] ss:$4 sm:$0xff] %v858
      %1076 = vst [vmem:[%s1065] ss:$4 sm:$0xff] %v840
      %v1077 = vld.sshfl [vmem:[#allocation1] sm:$0xff pattern:$0x73625140]
      %v1078 = vld.sshfl [vmem:[#allocation1 + $0x20] sm:$0xff pattern:$0x73625140]
      %1079 = vst [vmem:[#allocation1] ss:$4 sm:$0xff] %v859
      %1080 = vst [vmem:[%s1053] ss:$4 sm:$0xff] %v860
      %v1081 = vld.sshfl [vmem:[#allocation1] sm:$0xff pattern:$0x73625140]
      %1087 = vst [vmem:[#allocation1] ss:$4 sm:$0xff] %v877
      %s1088 = scalar_lea.vmem [#allocation1], 1
      %1089 = vst [vmem:[%s1088] ss:$4 sm:$0xff] %v880
      %s1090 = scalar_lea.vmem [#allocation1], 2
      %1091 = vst [vmem:[%s1090] ss:$4 sm:$0xff] %v883
      %s1092 = scalar_lea.vmem [#allocation1], 3
      %1093 = vst [vmem:[%s1092] ss:$4 sm:$0xff] %v887
      %s1094 = scalar_lea.vmem [#allocation1], 32
      %1095 = vst [vmem:[%s1094] ss:$4 sm:$0xff] %v890
      %s1096 = scalar_lea.vmem [#allocation1], 33
      %1097 = vst [vmem:[%s1096] ss:$4 sm:$0xff] %v893
      %s1098 = scalar_lea.vmem [#allocation1], 34
      %1099 = vst [vmem:[%s1098] ss:$4 sm:$0xff] %v897
      %s1100 = scalar_lea.vmem [#allocation1], 35
      %1101 = vst [vmem:[%s1100] ss:$4 sm:$0xff] %v900
      %v1102 = vld.sshfl [vmem:[#allocation1] sm:$0xff pattern:$0x73625140]
      %v1103 = vld.sshfl [vmem:[#allocation1 + $0x20] sm:$0xff pattern:$0x73625140]
      %1104 = vst [vmem:[#allocation1] ss:$4 sm:$0xff] %v903
      %1105 = vst [vmem:[%s1088] ss:$4 sm:$0xff] %v907
      %1106 = vst [vmem:[%s1090] ss:$4 sm:$0xff] %v910
      %1107 = vst [vmem:[%s1092] ss:$4 sm:$0xff] %v913
      %1108 = vst [vmem:[%s1094] ss:$4 sm:$0xff] %v917
      %1109 = vst [vmem:[%s1096] ss:$4 sm:$0xff] %v920
      %1110 = vst [vmem:[%s1098] ss:$4 sm:$0xff] %v923
      %1111 = vst [vmem:[%s1100] ss:$4 sm:$0xff] %v927
      %v1112 = vld.sshfl [vmem:[#allocation1] sm:$0xff pattern:$0x73625140]
      %v1113 = vld.sshfl [vmem:[#allocation1 + $0x20] sm:$0xff pattern:$0x73625140]
      %1114 = vst [vmem:[#allocation1] ss:$4 sm:$0xff] %v930
      %1115 = vst [vmem:[%s1088] ss:$4 sm:$0xff] %v933
      %v1116 = vld.sshfl [vmem:[#allocation1] sm:$0xff pattern:$0x73625140]
      %1117 = vrot.lane.b32.xlu0 %v1102, 64
      %v1118 = vpop.permute.xlu0 %1117
      %1119 = vrot.lane.b32.xlu0 %v1103, 64
      %v1120 = vpop.permute.xlu0 %1119
      %1121 = vrot.lane.b32.xlu0 %v1112, 64
      %v1122 = vpop.permute.xlu0 %1121
      %1123 = vrot.lane.b32.xlu0 %v1113, 64
      %v1124 = vpop.permute.xlu0 %1123
      %1125 = vrot.lane.b32.xlu0 %v1116, 64
      %v1126 = vpop.permute.xlu0 %1125
      %1132 = vst [vmem:[#allocation1] ss:$4 sm:$0xff] %v936
      %s1133 = scalar_lea.vmem [#allocation1], 1
      %1134 = vst [vmem:[%s1133] ss:$4 sm:$0xff] %v938
      %s1135 = scalar_lea.vmem [#allocation1], 2
      %1136 = vst [vmem:[%s1135] ss:$4 sm:$0xff] %v940
      %s1137 = scalar_lea.vmem [#allocation1], 3
      %1138 = vst [vmem:[%s1137] ss:$4 sm:$0xff] %v943
      %s1139 = scalar_lea.vmem [#allocation1], 32
      %1140 = vst [vmem:[%s1139] ss:$4 sm:$0xff] %v945
      %s1141 = scalar_lea.vmem [#allocation1], 33
      %1142 = vst [vmem:[%s1141] ss:$4 sm:$0xff] %v947
      %s1143 = scalar_lea.vmem [#allocation1], 34
      %1144 = vst [vmem:[%s1143] ss:$4 sm:$0xff] %v949
      %s1145 = scalar_lea.vmem [#allocation1], 35
      %1146 = vst [vmem:[%s1145] ss:$4 sm:$0xff] %v950
      %v1147 = vld.sshfl [vmem:[#allocation1] sm:$0xff pattern:$0x73625140]
      %v1148 = vld.sshfl [vmem:[#allocation1 + $0x20] sm:$0xff pattern:$0x73625140]
      %1149 = vst [vmem:[#allocation1] ss:$4 sm:$0xff] %v951
      %1150 = vst [vmem:[%s1133] ss:$4 sm:$0xff] %v953
      %1151 = vst [vmem:[%s1135] ss:$4 sm:$0xff] %v954
      %1152 = vst [vmem:[%s1137] ss:$4 sm:$0xff] %v955
      %1153 = vst [vmem:[%s1139] ss:$4 sm:$0xff] %v957
      %1154 = vst [vmem:[%s1141] ss:$4 sm:$0xff] %v958
      %1155 = vst [vmem:[%s1143] ss:$4 sm:$0xff] %v959
      %1156 = vst [vmem:[%s1145] ss:$4 sm:$0xff] %v961
      %v1157 = vld.sshfl [vmem:[#allocation1] sm:$0xff pattern:$0x73625140]
      %v1158 = vld.sshfl [vmem:[#allocation1 + $0x20] sm:$0xff pattern:$0x73625140]
      %1159 = vst [vmem:[#allocation1] ss:$4 sm:$0xff] %v962
      %1160 = vst [vmem:[%s1133] ss:$4 sm:$0xff] %v963
      %v1161 = vld.sshfl [vmem:[#allocation1] sm:$0xff pattern:$0x73625140]
      %1167 = vst [vmem:[#allocation1] ss:$4 sm:$0xff] %v836
      %s1168 = scalar_lea.vmem [#allocation1], 1
      %1169 = vst [vmem:[%s1168] ss:$4 sm:$0xff] %v851
      %s1170 = scalar_lea.vmem [#allocation1], 2
      %1171 = vst [vmem:[%s1170] ss:$4 sm:$0xff] %v852
      %s1172 = scalar_lea.vmem [#allocation1], 3
      %1173 = vst [vmem:[%s1172] ss:$4 sm:$0xff] %v837
      %s1174 = scalar_lea.vmem [#allocation1], 32
      %1175 = vst [vmem:[%s1174] ss:$4 sm:$0xff] %v853
      %s1176 = scalar_lea.vmem [#allocation1], 33
      %1177 = vst [vmem:[%s1176] ss:$4 sm:$0xff] %v854
      %s1178 = scalar_lea.vmem [#allocation1], 34
      %1179 = vst [vmem:[%s1178] ss:$4 sm:$0xff] %v838
      %s1180 = scalar_lea.vmem [#allocation1], 35
      %1181 = vst [vmem:[%s1180] ss:$4 sm:$0xff] %v855
      %v1182 = vld.sshfl [vmem:[#allocation1] sm:$0xff pattern:$0x73625140]
      %v1183 = vld.sshfl [vmem:[#allocation1 + $0x20] sm:$0xff pattern:$0x73625140]
      %1184 = vst [vmem:[#allocation1] ss:$4 sm:$0xff] %v856
      %1185 = vst [vmem:[%s1168] ss:$4 sm:$0xff] %v839
      %1186 = vst [vmem:[%s1170] ss:$4 sm:$0xff] %v857
      %1187 = vst [vmem:[%s1172] ss:$4 sm:$0xff] %v858
      %1188 = vst [vmem:[%s1174] ss:$4 sm:$0xff] %v840
      %1189 = vst [vmem:[%s1176] ss:$4 sm:$0xff] %v859
      %1190 = vst [vmem:[%s1178] ss:$4 sm:$0xff] %v860
      %1191 = vst [vmem:[%s1180] ss:$4 sm:$0xff] %v841
      %v1192 = vld.sshfl [vmem:[#allocation1] sm:$0xff pattern:$0x73625140]
      %v1193 = vld.sshfl [vmem:[#allocation1 + $0x20] sm:$0xff pattern:$0x73625140]
      %1194 = vst [vmem:[#allocation1] ss:$4 sm:$0xff] %v965
      %1195 = vst [vmem:[%s1168] ss:$4 sm:$0xff] %v966
      %v1196 = vld.sshfl [vmem:[#allocation1] sm:$0xff pattern:$0x73625140]
      %1197 = vrot.lane.b32.xlu0 %v1182, 64
      %v1198 = vpop.permute.xlu0 %1197
      %1199 = vrot.lane.b32.xlu0 %v1183, 64
      %v1200 = vpop.permute.xlu0 %1199
      %1201 = vrot.lane.b32.xlu0 %v1192, 64
      %v1202 = vpop.permute.xlu0 %1201
      %1203 = vrot.lane.b32.xlu0 %v1193, 64
      %v1204 = vpop.permute.xlu0 %1203
      %1205 = vrot.lane.b32.xlu0 %v1196, 64
      %v1206 = vpop.permute.xlu0 %1205
      %1212 = vst [vmem:[#allocation1] ss:$4 sm:$0xff] %v887
      %s1213 = scalar_lea.vmem [#allocation1], 1
      %1214 = vst [vmem:[%s1213] ss:$4 sm:$0xff] %v890
      %s1215 = scalar_lea.vmem [#allocation1], 2
      %1216 = vst [vmem:[%s1215] ss:$4 sm:$0xff] %v893
      %s1217 = scalar_lea.vmem [#allocation1], 3
      %1218 = vst [vmem:[%s1217] ss:$4 sm:$0xff] %v897
      %s1219 = scalar_lea.vmem [#allocation1], 32
      %1220 = vst [vmem:[%s1219] ss:$4 sm:$0xff] %v900
      %s1221 = scalar_lea.vmem [#allocation1], 33
      %1222 = vst [vmem:[%s1221] ss:$4 sm:$0xff] %v903
      %s1223 = scalar_lea.vmem [#allocation1], 34
      %1224 = vst [vmem:[%s1223] ss:$4 sm:$0xff] %v907
      %s1225 = scalar_lea.vmem [#allocation1], 35
      %1226 = vst [vmem:[%s1225] ss:$4 sm:$0xff] %v910
      %v1227 = vld.sshfl [vmem:[#allocation1] sm:$0xff pattern:$0x73625140]
      %v1228 = vld.sshfl [vmem:[#allocation1 + $0x20] sm:$0xff pattern:$0x73625140]
      %1229 = vst [vmem:[#allocation1] ss:$4 sm:$0xff] %v913
      %1230 = vst [vmem:[%s1213] ss:$4 sm:$0xff] %v917
      %1231 = vst [vmem:[%s1215] ss:$4 sm:$0xff] %v920
      %1232 = vst [vmem:[%s1217] ss:$4 sm:$0xff] %v923
      %1233 = vst [vmem:[%s1219] ss:$4 sm:$0xff] %v927
      %1234 = vst [vmem:[%s1221] ss:$4 sm:$0xff] %v930
      %1235 = vst [vmem:[%s1223] ss:$4 sm:$0xff] %v933
      %1236 = vst [vmem:[%s1225] ss:$4 sm:$0xff] %v971
      %v1237 = vld.sshfl [vmem:[#allocation1] sm:$0xff pattern:$0x73625140]
      %v1238 = vld.sshfl [vmem:[#allocation1 + $0x20] sm:$0xff pattern:$0x73625140]
      %1239 = vst [vmem:[#allocation1] ss:$4 sm:$0xff] %v974
      %1240 = vst [vmem:[%s1213] ss:$4 sm:$0xff] %v977
      %v1241 = vld.sshfl [vmem:[#allocation1] sm:$0xff pattern:$0x73625140]
      %1247 = vst [vmem:[#allocation1] ss:$4 sm:$0xff] %v980
      %s1248 = scalar_lea.vmem [#allocation1], 1
      %1249 = vst [vmem:[%s1248] ss:$4 sm:$0xff] %v982
      %s1250 = scalar_lea.vmem [#allocation1], 2
      %1251 = vst [vmem:[%s1250] ss:$4 sm:$0xff] %v984
      %s1252 = scalar_lea.vmem [#allocation1], 3
      %1253 = vst [vmem:[%s1252] ss:$4 sm:$0xff] %v987
      %s1254 = scalar_lea.vmem [#allocation1], 32
      %1255 = vst [vmem:[%s1254] ss:$4 sm:$0xff] %v989
      %s1256 = scalar_lea.vmem [#allocation1], 33
      %1257 = vst [vmem:[%s1256] ss:$4 sm:$0xff] %v991
      %s1258 = scalar_lea.vmem [#allocation1], 34
      %1259 = vst [vmem:[%s1258] ss:$4 sm:$0xff] %v993
      %s1260 = scalar_lea.vmem [#allocation1], 35
      %1261 = vst [vmem:[%s1260] ss:$4 sm:$0xff] %v994
      %v1262 = vld.sshfl [vmem:[#allocation1] sm:$0xff pattern:$0x73625140]
      %v1263 = vld.sshfl [vmem:[#allocation1 + $0x20] sm:$0xff pattern:$0x73625140]
      %1264 = vst [vmem:[#allocation1] ss:$4 sm:$0xff] %v995
      %1265 = vst [vmem:[%s1248] ss:$4 sm:$0xff] %v997
      %1266 = vst [vmem:[%s1250] ss:$4 sm:$0xff] %v998
      %1267 = vst [vmem:[%s1252] ss:$4 sm:$0xff] %v999
      %1268 = vst [vmem:[%s1254] ss:$4 sm:$0xff] %v1001
      %1269 = vst [vmem:[%s1256] ss:$4 sm:$0xff] %v1002
      %1270 = vst [vmem:[%s1258] ss:$4 sm:$0xff] %v1003
      %1271 = vst [vmem:[%s1260] ss:$4 sm:$0xff] %v1005
      %v1272 = vld.sshfl [vmem:[#allocation1] sm:$0xff pattern:$0x73625140]
      %v1273 = vld.sshfl [vmem:[#allocation1 + $0x20] sm:$0xff pattern:$0x73625140]
      %1274 = vst [vmem:[#allocation1] ss:$4 sm:$0xff] %v1006
      %1275 = vst [vmem:[%s1248] ss:$4 sm:$0xff] %v1007
      %v1276 = vld.sshfl [vmem:[#allocation1] sm:$0xff pattern:$0x73625140]
      %1277 = vrot.lane.b32.xlu0 %v1262, 64
      %v1278 = vpop.permute.xlu0 %1277
      %1279 = vrot.lane.b32.xlu0 %v1263, 64
      %v1280 = vpop.permute.xlu0 %1279
      %1281 = vrot.lane.b32.xlu0 %v1272, 64
      %v1282 = vpop.permute.xlu0 %1281
      %1283 = vrot.lane.b32.xlu0 %v1273, 64
      %v1284 = vpop.permute.xlu0 %1283
      %1285 = vrot.lane.b32.xlu0 %v1276, 64
      %v1286 = vpop.permute.xlu0 %1285
      %1292 = vst [vmem:[#allocation1] ss:$4 sm:$0xff] %v837
      %s1293 = scalar_lea.vmem [#allocation1], 1
      %1294 = vst [vmem:[%s1293] ss:$4 sm:$0xff] %v853
      %s1295 = scalar_lea.vmem [#allocation1], 2
      %1296 = vst [vmem:[%s1295] ss:$4 sm:$0xff] %v854
      %s1297 = scalar_lea.vmem [#allocation1], 3
      %1298 = vst [vmem:[%s1297] ss:$4 sm:$0xff] %v838
      %s1299 = scalar_lea.vmem [#allocation1], 32
      %1300 = vst [vmem:[%s1299] ss:$4 sm:$0xff] %v855
      %s1301 = scalar_lea.vmem [#allocation1], 33
      %1302 = vst [vmem:[%s1301] ss:$4 sm:$0xff] %v856
      %s1303 = scalar_lea.vmem [#allocation1], 34
      %1304 = vst [vmem:[%s1303] ss:$4 sm:$0xff] %v839
      %s1305 = scalar_lea.vmem [#allocation1], 35
      %1306 = vst [vmem:[%s1305] ss:$4 sm:$0xff] %v857
      %v1307 = vld.sshfl [vmem:[#allocation1] sm:$0xff pattern:$0x73625140]
      %v1308 = vld.sshfl [vmem:[#allocation1 + $0x20] sm:$0xff pattern:$0x73625140]
      %1309 = vst [vmem:[#allocation1] ss:$4 sm:$0xff] %v858
      %1310 = vst [vmem:[%s1293] ss:$4 sm:$0xff] %v840
      %1311 = vst [vmem:[%s1295] ss:$4 sm:$0xff] %v859
      %1312 = vst [vmem:[%s1297] ss:$4 sm:$0xff] %v860
      %1313 = vst [vmem:[%s1299] ss:$4 sm:$0xff] %v841
      %1314 = vst [vmem:[%s1301] ss:$4 sm:$0xff] %v965
      %1315 = vst [vmem:[%s1303] ss:$4 sm:$0xff] %v966
      %1316 = vst [vmem:[%s1305] ss:$4 sm:$0xff] %v842
      %v1317 = vld.sshfl [vmem:[#allocation1] sm:$0xff pattern:$0x73625140]
      %v1318 = vld.sshfl [vmem:[#allocation1 + $0x20] sm:$0xff pattern:$0x73625140]
      %1319 = vst [vmem:[#allocation1] ss:$4 sm:$0xff] %v1009
      %1320 = vst [vmem:[%s1293] ss:$4 sm:$0xff] %v1010
      %v1321 = vld.sshfl [vmem:[#allocation1] sm:$0xff pattern:$0x73625140]
      %1327 = vst [vmem:[#allocation1] ss:$4 sm:$0xff] %v897
      %s1328 = scalar_lea.vmem [#allocation1], 1
      %1329 = vst [vmem:[%s1328] ss:$4 sm:$0xff] %v900
      %s1330 = scalar_lea.vmem [#allocation1], 2
      %1331 = vst [vmem:[%s1330] ss:$4 sm:$0xff] %v903
      %s1332 = scalar_lea.vmem [#allocation1], 3
      %1333 = vst [vmem:[%s1332] ss:$4 sm:$0xff] %v907
      %s1334 = scalar_lea.vmem [#allocation1], 32
      %1335 = vst [vmem:[%s1334] ss:$4 sm:$0xff] %v910
      %s1336 = scalar_lea.vmem [#allocation1], 33
      %1337 = vst [vmem:[%s1336] ss:$4 sm:$0xff] %v913
      %s1338 = scalar_lea.vmem [#allocation1], 34
      %1339 = vst [vmem:[%s1338] ss:$4 sm:$0xff] %v917
      %s1340 = scalar_lea.vmem [#allocation1], 35
      %1341 = vst [vmem:[%s1340] ss:$4 sm:$0xff] %v920
      %v1342 = vld.sshfl [vmem:[#allocation1] sm:$0xff pattern:$0x73625140]
      %v1343 = vld.sshfl [vmem:[#allocation1 + $0x20] sm:$0xff pattern:$0x73625140]
      %1344 = vst [vmem:[#allocation1] ss:$4 sm:$0xff] %v923
      %1345 = vst [vmem:[%s1328] ss:$4 sm:$0xff] %v927
      %1346 = vst [vmem:[%s1330] ss:$4 sm:$0xff] %v930
      %1347 = vst [vmem:[%s1332] ss:$4 sm:$0xff] %v933
      %1348 = vst [vmem:[%s1334] ss:$4 sm:$0xff] %v971
      %1349 = vst [vmem:[%s1336] ss:$4 sm:$0xff] %v974
      %1350 = vst [vmem:[%s1338] ss:$4 sm:$0xff] %v977
      %1351 = vst [vmem:[%s1340] ss:$4 sm:$0xff] %v1015
      %v1352 = vld.sshfl [vmem:[#allocation1] sm:$0xff pattern:$0x73625140]
      %v1353 = vld.sshfl [vmem:[#allocation1 + $0x20] sm:$0xff pattern:$0x73625140]
      %1354 = vst [vmem:[#allocation1] ss:$4 sm:$0xff] %v1018
      %1355 = vst [vmem:[%s1328] ss:$4 sm:$0xff] %v1021
      %v1356 = vld.sshfl [vmem:[#allocation1] sm:$0xff pattern:$0x73625140]
      %1357 = vrot.lane.b32.xlu0 %v1342, 64
      %v1358 = vpop.permute.xlu0 %1357
      %1359 = vrot.lane.b32.xlu0 %v1343, 64
      %v1360 = vpop.permute.xlu0 %1359
      %1361 = vrot.lane.b32.xlu0 %v1352, 64
      %v1362 = vpop.permute.xlu0 %1361
      %1363 = vrot.lane.b32.xlu0 %v1353, 64
      %v1364 = vpop.permute.xlu0 %1363
      %1365 = vrot.lane.b32.xlu0 %v1356, 64
      %v1366 = vpop.permute.xlu0 %1365
      %1372 = vst [vmem:[#allocation1] ss:$4 sm:$0xff] %v1024
      %s1373 = scalar_lea.vmem [#allocation1], 1
      %1374 = vst [vmem:[%s1373] ss:$4 sm:$0xff] %v1026
      %s1375 = scalar_lea.vmem [#allocation1], 2
      %1376 = vst [vmem:[%s1375] ss:$4 sm:$0xff] %v1028
      %s1377 = scalar_lea.vmem [#allocation1], 3
      %1378 = vst [vmem:[%s1377] ss:$4 sm:$0xff] %v1031
      %s1379 = scalar_lea.vmem [#allocation1], 32
      %1380 = vst [vmem:[%s1379] ss:$4 sm:$0xff] %v1033
      %s1381 = scalar_lea.vmem [#allocation1], 33
      %1382 = vst [vmem:[%s1381] ss:$4 sm:$0xff] %v1035
      %s1383 = scalar_lea.vmem [#allocation1], 34
      %1384 = vst [vmem:[%s1383] ss:$4 sm:$0xff] %v1037
      %s1385 = scalar_lea.vmem [#allocation1], 35
      %1386 = vst [vmem:[%s1385] ss:$4 sm:$0xff] %v1038
      %v1387 = vld.sshfl [vmem:[#allocation1] sm:$0xff pattern:$0x73625140]
      %v1388 = vld.sshfl [vmem:[#allocation1 + $0x20] sm:$0xff pattern:$0x73625140]
      %1389 = vst [vmem:[#allocation1] ss:$4 sm:$0xff] %v1039
      %1390 = vst [vmem:[%s1373] ss:$4 sm:$0xff] %v1041
      %1391 = vst [vmem:[%s1375] ss:$4 sm:$0xff] %v1042
      %1392 = vst [vmem:[%s1377] ss:$4 sm:$0xff] %v1043
      %1393 = vst [vmem:[%s1379] ss:$4 sm:$0xff] %v1045
      %1394 = vst [vmem:[%s1381] ss:$4 sm:$0xff] %v1046
      %1395 = vst [vmem:[%s1383] ss:$4 sm:$0xff] %v1047
      %1396 = vst [vmem:[%s1385] ss:$4 sm:$0xff] %v1049
      %v1397 = vld.sshfl [vmem:[#allocation1] sm:$0xff pattern:$0x73625140]
      %v1398 = vld.sshfl [vmem:[#allocation1 + $0x20] sm:$0xff pattern:$0x73625140]
      %1399 = vst [vmem:[#allocation1] ss:$4 sm:$0xff] %v1050
      %1400 = vst [vmem:[%s1373] ss:$4 sm:$0xff] %v1051
      %v1401 = vld.sshfl [vmem:[#allocation1] sm:$0xff pattern:$0x73625140]
      %v1402 = vsel %vm254, %v1067, %v1118
      %v1403 = vsel %vm254, %v1068, %v1120
      %v1404 = vsel %vm254, %v1077, %v1122
      %v1405 = vsel %vm254, %v1078, %v1124
      %v1406 = vsel %vm254, %v1081, %v1126
      %v1407 = vsel %vm254, %v1147, %v1198
      %v1408 = vsel %vm254, %v1148, %v1200
      %v1409 = vsel %vm254, %v1157, %v1202
      %v1410 = vsel %vm254, %v1158, %v1204
      %v1411 = vsel %vm254, %v1161, %v1206
      %v1412 = vsel %vm254, %v1227, %v1278
      %v1413 = vsel %vm254, %v1228, %v1280
      %v1414 = vsel %vm254, %v1237, %v1282
      %v1415 = vsel %vm254, %v1238, %v1284
      %v1416 = vsel %vm254, %v1241, %v1286
      %v1417 = vsel %vm254, %v1307, %v1358
      %v1418 = vsel %vm254, %v1308, %v1360
      %v1419 = vsel %vm254, %v1317, %v1362
      %v1420 = vsel %vm254, %v1318, %v1364
      %v1421 = vsel %vm254, %v1321, %v1366
      %v1422 = vld [vmem:[%s4] sm:$0xff]
      %v1423 = vld [vmem:[%s4 + $0x8] sm:$0xff]
      %v1424 = vld [vmem:[%s4 + $0x10] sm:$0xff]
      %v1425 = vld [vmem:[%s4 + $0x18] sm:$0xff]
      %v1426 = vld [vmem:[%s4 + $0x20] sm:$0xff]
      %v1427 = vld [vmem:[%s4 + $0x28] sm:$0xff]
      %v1428 = vld [vmem:[%s4 + $0x30] sm:$0xff]
      %v1429 = vld [vmem:[%s4 + $0x38] sm:$0xff]
      %v1430 = vld [vmem:[%s4 + $0x40] sm:$0xff]
      %v1431 = vld [vmem:[%s4 + $0x48] sm:$0xff]
      %v1432 = vld [vmem:[%s4 + $0x50] sm:$0xff]
      %v1433 = vld [vmem:[%s4 + $0x58] sm:$0xff]
      %v1434 = vld [vmem:[%s4 + $0x60] sm:$0xff]
      %v1435 = vld [vmem:[%s4 + $0x68] sm:$0xff]
      %v1436 = vld [vmem:[%s4 + $0x70] sm:$0xff]
      %v1437 = vld [vmem:[%s4 + $0x78] sm:$0xff]
      %v1438 = vld [vmem:[%s4 + $0x80] sm:$0xff]
      %v1439 = vld [vmem:[%s4 + $0x88] sm:$0xff]
      %v1440 = vld [vmem:[%s4 + $0x90] sm:$0xff]
      %v1441 = vld [vmem:[%s4 + $0x98] sm:$0xff]
      %v1442 = vld [vmem:[%s4 + $0xa0] sm:$0xff]
      %v1443 = vld [vmem:[%s4 + $0xa8] sm:$0xff]
      %v1444 = vld [vmem:[%s4 + $0xb0] sm:$0xff]
      %v1445 = vld [vmem:[%s4 + $0xb8] sm:$0xff]
      %v1446 = vld [vmem:[%s4 + $0xc0] sm:$0xff]
      %v1447 = vld [vmem:[%s4 + $0xc8] sm:$0xff]
      %v1448 = vld [vmem:[%s4 + $0xd0] sm:$0xff]
      %v1449 = vld [vmem:[%s4 + $0xd8] sm:$0xff]
      %v1450 = vld [vmem:[%s4 + $0xe0] sm:$0xff]
      %v1451 = vld [vmem:[%s4 + $0xe8] sm:$0xff]
      %v1452 = vld [vmem:[%s4 + $0xf0] sm:$0xff]
      %v1453 = vld [vmem:[%s4 + $0xf8] sm:$0xff]
      %v1454 = vld [vmem:[%s4 + $0x100] sm:$0xff]
      %v1455 = vld [vmem:[%s4 + $0x108] sm:$0xff]
      %v1456 = vld [vmem:[%s4 + $0x110] sm:$0xff]
      %v1457 = vld [vmem:[%s4 + $0x118] sm:$0xff]
      %v1458 = vld [vmem:[%s4 + $0x120] sm:$0xff]
      %v1459 = vld [vmem:[%s4 + $0x128] sm:$0xff]
      %v1460 = vld [vmem:[%s4 + $0x130] sm:$0xff]
      %v1461 = vld [vmem:[%s4 + $0x138] sm:$0xff]
      %v1462 = vld [vmem:[%s4 + $0x140] sm:$0xff]
      %v1463 = vld [vmem:[%s4 + $0x148] sm:$0xff]
      %v1464 = vld [vmem:[%s4 + $0x150] sm:$0xff]
      %v1465 = vld [vmem:[%s4 + $0x158] sm:$0xff]
      %v1466 = vld [vmem:[%s4 + $0x160] sm:$0xff]
      %v1467 = vld [vmem:[%s4 + $0x168] sm:$0xff]
      %v1468 = vld [vmem:[%s4 + $0x170] sm:$0xff]
      %v1469 = vld [vmem:[%s4 + $0x178] sm:$0xff]
      %v1470 = vld [vmem:[%s4 + $0x180] sm:$0xff]
      %v1471 = vld [vmem:[%s4 + $0x188] sm:$0xff]
      %v1472 = vld [vmem:[%s4 + $0x190] sm:$0xff]
      %v1473 = vld [vmem:[%s4 + $0x198] sm:$0xff]
      %v1474 = vld [vmem:[%s4 + $0x1a0] sm:$0xff]
      %v1475 = vld [vmem:[%s4 + $0x1a8] sm:$0xff]
      %v1476 = vld [vmem:[%s4 + $0x1b0] sm:$0xff]
      %v1477 = vld [vmem:[%s4 + $0x1b8] sm:$0xff]
      %v1478 = vld [vmem:[%s4 + $0x1c0] sm:$0xff]
      %v1479 = vld [vmem:[%s4 + $0x1c8] sm:$0xff]
      %v1480 = vld [vmem:[%s4 + $0x1d0] sm:$0xff]
      %v1481 = vld [vmem:[%s4 + $0x1d8] sm:$0xff]
      %v1482 = vld [vmem:[%s4 + $0x1e0] sm:$0xff]
      %v1483 = vld [vmem:[%s4 + $0x1e8] sm:$0xff]
      %v1484 = vld [vmem:[%s4 + $0x1f0] sm:$0xff]
      %v1485 = vld [vmem:[%s4 + $0x1f8] sm:$0xff]
      %v1486 = vld [vmem:[%s4 + $0x200] sm:$0xff]
      %v1487 = vld [vmem:[%s4 + $0x208] sm:$0xff]
      %v1488 = vld [vmem:[%s4 + $0x210] sm:$0xff]
      %v1489 = vld [vmem:[%s4 + $0x218] sm:$0xff]
      %v1490 = vld [vmem:[%s4 + $0x220] sm:$0xff]
      %v1491 = vld [vmem:[%s4 + $0x228] sm:$0xff]
      %v1492 = vld [vmem:[%s4 + $0x230] sm:$0xff]
      %v1493 = vld [vmem:[%s4 + $0x238] sm:$0xff]
      %v1494 = vld [vmem:[%s5] sm:$0x1]
      %v1496 = vperm.slane %v1494, 0
      %v1498 = vsel %vm254, %v1387, 0
      %v1500 = vsel %vm254, %v1388, 0
      %v1502 = vsel %vm254, %v1397, 0
      %v1504 = vsel %vm254, %v1398, 0
      %v1506 = vsel %vm254, %v1401, 0
      %1508 = vmatpush.msra.mxu0 %v1437
      %1509 = vmatpush.msra.mxu0 %v1436
      %1510 = vmatpush.msra.mxu0 %v1435
      %1511 = vmatpush.msra.mxu0 %v1434
      %1512 = vmatpush.msra.mxu0 %v1433
      %1513 = vmatpush.msra.mxu0 %v1432
      %1514 = vmatpush.msra.mxu0 %v1431
      %1515 = vmatpush.msra.mxu0 %v1430
      %1516 = vmatpush.msra.mxu0 %v1429
      %1517 = vmatpush.msra.mxu0 %v1428
      %1518 = vmatpush.msra.mxu0 %v1427
      %1519 = vmatpush.msra.mxu0 %v1426
      %1520 = vmatpush.msra.mxu0 %v1425
      %1521 = vmatpush.msra.mxu0 %v1424
      %1522 = vmatpush.msra.mxu0 %v1423
      %1523 = vmatpush.msra.mxu0 %v1422
      %1524 = vmatmul.f32.gmra.mxu0 %v1402
      %v1525 = vpop.f32.mrf.mxu0
      %v1526 = vadd.f32 %v1496, %v1525
      %1527 = vmatmul.f32.gmra.mxu0 %v1403
      %v1528 = vpop.f32.mrf.mxu0
      %v1529 = vadd.f32 %v1496, %v1528
      %1530 = vmatmul.f32.gmra.mxu0 %v1404
      %v1531 = vpop.f32.mrf.mxu0
      %v1532 = vadd.f32 %v1496, %v1531
      %1533 = vmatmul.f32.gmra.mxu0 %v1405
      %v1534 = vpop.f32.mrf.mxu0
      %v1535 = vadd.f32 %v1496, %v1534
      %1536 = vmatmul.f32.gmra.mxu0 %v1406
      %v1537 = vpop.f32.mrf.mxu0
      %v1538 = vadd.f32 %v1496, %v1537
      %1539 = vdwg.mxu0
      %1540 = vmatpush.msra.mxu0 %v1453
      %1541 = vmatpush.msra.mxu0 %v1452
      %1542 = vmatpush.msra.mxu0 %v1451
      %1543 = vmatpush.msra.mxu0 %v1450
      %1544 = vmatpush.msra.mxu0 %v1449
      %1545 = vmatpush.msra.mxu0 %v1448
      %1546 = vmatpush.msra.mxu0 %v1447
      %1547 = vmatpush.msra.mxu0 %v1446
      %1548 = vmatpush.msra.mxu0 %v1445
      %1549 = vmatpush.msra.mxu0 %v1444
      %1550 = vmatpush.msra.mxu0 %v1443
      %1551 = vmatpush.msra.mxu0 %v1442
      %1552 = vmatpush.msra.mxu0 %v1441
      %1553 = vmatpush.msra.mxu0 %v1440
      %1554 = vmatpush.msra.mxu0 %v1439
      %1555 = vmatpush.msra.mxu0 %v1438
      %1556 = vmatmul.f32.gmra.mxu0 %v1407
      %v1557 = vpop.f32.mrf.mxu0
      %v1558 = vadd.f32 %v1526, %v1557
      %1559 = vmatmul.f32.gmra.mxu0 %v1408
      %v1560 = vpop.f32.mrf.mxu0
      %v1561 = vadd.f32 %v1529, %v1560
      %1562 = vmatmul.f32.gmra.mxu0 %v1409
      %v1563 = vpop.f32.mrf.mxu0
      %v1564 = vadd.f32 %v1532, %v1563
      %1565 = vmatmul.f32.gmra.mxu0 %v1410
      %v1566 = vpop.f32.mrf.mxu0
      %v1567 = vadd.f32 %v1535, %v1566
      %1568 = vmatmul.f32.gmra.mxu0 %v1411
      %v1569 = vpop.f32.mrf.mxu0
      %v1570 = vadd.f32 %v1538, %v1569
      %1571 = vdwg.mxu0
      %1572 = vmatpush.msra.mxu0 %v1469
      %1573 = vmatpush.msra.mxu0 %v1468
      %1574 = vmatpush.msra.mxu0 %v1467
      %1575 = vmatpush.msra.mxu0 %v1466
      %1576 = vmatpush.msra.mxu0 %v1465
      %1577 = vmatpush.msra.mxu0 %v1464
      %1578 = vmatpush.msra.mxu0 %v1463
      %1579 = vmatpush.msra.mxu0 %v1462
      %1580 = vmatpush.msra.mxu0 %v1461
      %1581 = vmatpush.msra.mxu0 %v1460
      %1582 = vmatpush.msra.mxu0 %v1459
      %1583 = vmatpush.msra.mxu0 %v1458
      %1584 = vmatpush.msra.mxu0 %v1457
      %1585 = vmatpush.msra.mxu0 %v1456
      %1586 = vmatpush.msra.mxu0 %v1455
      %1587 = vmatpush.msra.mxu0 %v1454
      %1588 = vmatmul.f32.gmra.mxu0 %v1412
      %v1589 = vpop.f32.mrf.mxu0
      %v1590 = vadd.f32 %v1558, %v1589
      %1591 = vmatmul.f32.gmra.mxu0 %v1413
      %v1592 = vpop.f32.mrf.mxu0
      %v1593 = vadd.f32 %v1561, %v1592
      %1594 = vmatmul.f32.gmra.mxu0 %v1414
      %v1595 = vpop.f32.mrf.mxu0
      %v1596 = vadd.f32 %v1564, %v1595
      %1597 = vmatmul.f32.gmra.mxu0 %v1415
      %v1598 = vpop.f32.mrf.mxu0
      %v1599 = vadd.f32 %v1567, %v1598
      %1600 = vmatmul.f32.gmra.mxu0 %v1416
      %v1601 = vpop.f32.mrf.mxu0
      %v1602 = vadd.f32 %v1570, %v1601
      %1603 = vdwg.mxu0
      %1604 = vmatpush.msra.mxu0 %v1485
      %1605 = vmatpush.msra.mxu0 %v1484
      %1606 = vmatpush.msra.mxu0 %v1483
      %1607 = vmatpush.msra.mxu0 %v1482
      %1608 = vmatpush.msra.mxu0 %v1481
      %1609 = vmatpush.msra.mxu0 %v1480
      %1610 = vmatpush.msra.mxu0 %v1479
      %1611 = vmatpush.msra.mxu0 %v1478
      %1612 = vmatpush.msra.mxu0 %v1477
      %1613 = vmatpush.msra.mxu0 %v1476
      %1614 = vmatpush.msra.mxu0 %v1475
      %1615 = vmatpush.msra.mxu0 %v1474
      %1616 = vmatpush.msra.mxu0 %v1473
      %1617 = vmatpush.msra.mxu0 %v1472
      %1618 = vmatpush.msra.mxu0 %v1471
      %1619 = vmatpush.msra.mxu0 %v1470
      %1620 = vmatmul.f32.gmra.mxu0 %v1417
      %v1621 = vpop.f32.mrf.mxu0
      %v1622 = vadd.f32 %v1590, %v1621
      %1623 = vmatmul.f32.gmra.mxu0 %v1418
      %v1624 = vpop.f32.mrf.mxu0
      %v1625 = vadd.f32 %v1593, %v1624
      %1626 = vmatmul.f32.gmra.mxu0 %v1419
      %v1627 = vpop.f32.mrf.mxu0
      %v1628 = vadd.f32 %v1596, %v1627
      %1629 = vmatmul.f32.gmra.mxu0 %v1420
      %v1630 = vpop.f32.mrf.mxu0
      %v1631 = vadd.f32 %v1599, %v1630
      %1632 = vmatmul.f32.gmra.mxu0 %v1421
      %v1633 = vpop.f32.mrf.mxu0
      %v1634 = vadd.f32 %v1602, %v1633
      %1635 = vdwg.mxu0
      %1636 = vmatpush.msra.mxu0 0.0
      %1637 = vmatpush.msra.mxu0 0.0
      %1638 = vmatpush.msra.mxu0 0.0
      %1639 = vmatpush.msra.mxu0 0.0
      %1640 = vmatpush.msra.mxu0 0.0
      %1641 = vmatpush.msra.mxu0 0.0
      %1642 = vmatpush.msra.mxu0 0.0
      %1643 = vmatpush.msra.mxu0 0.0
      %1644 = vmatpush.msra.mxu0 %v1493
      %1645 = vmatpush.msra.mxu0 %v1492
      %1646 = vmatpush.msra.mxu0 %v1491
      %1647 = vmatpush.msra.mxu0 %v1490
      %1648 = vmatpush.msra.mxu0 %v1489
      %1649 = vmatpush.msra.mxu0 %v1488
      %1650 = vmatpush.msra.mxu0 %v1487
      %1651 = vmatpush.msra.mxu0 %v1486
      %1652 = vmatmul.f32.gmra.mxu0 %v1498
      %v1653 = vpop.f32.mrf.mxu0
      %v1654 = vadd.f32 %v1622, %v1653
      %1655 = vmatmul.f32.gmra.mxu0 %v1500
      %v1656 = vpop.f32.mrf.mxu0
      %v1657 = vadd.f32 %v1625, %v1656
      %1658 = vmatmul.f32.gmra.mxu0 %v1502
      %v1659 = vpop.f32.mrf.mxu0
      %v1660 = vadd.f32 %v1628, %v1659
      %1661 = vmatmul.f32.gmra.mxu0 %v1504
      %v1662 = vpop.f32.mrf.mxu0
      %v1663 = vadd.f32 %v1631, %v1662
      %1664 = vmatmul.f32.gmra.mxu0 %v1506
      %v1665 = vpop.f32.mrf.mxu0
      %v1666 = vadd.f32 %v1634, %v1665
      %1667 = vdwg.mxu0
      %vm1668 = vcmask 23552
      %1669 = vst.msk [vmem:[%s253] sm:$0xff] %vm1668, 0.0
      %1670 = vst.msk [vmem:[%s253 + $0x8] sm:$0xff] %vm1668, 0.0
      %1671 = vst.msk [vmem:[%s253 + $0x10] sm:$0xff] %vm1668, 0.0
      %1672 = vst.msk [vmem:[%s253 + $0x18] sm:$0xff] %vm1668, 0.0
      %1673 = vst.msk [vmem:[%s253 + $0x20] sm:$0xff] %vm1668, 0.0
      %1674 = vst.msk [vmem:[%s253 + $0x28] sm:$0xff] %vm1668, 0.0
      %1675 = vst.msk [vmem:[%s253 + $0x30] sm:$0xff] %vm1668, 0.0
      %1676 = vst.msk [vmem:[%s253 + $0x38] sm:$0xff] %vm1668, 0.0
      %v1677 = vtanh.pop %v1654
      %v1678 = vtanh.pop %v1657
      %v1679 = vtanh.pop %v1660
      %v1680 = vtanh.pop %v1663
      %v1681 = vtanh.pop %v1666
      %v1687 = vrot.slane %v1677, 2
      %v1688 = vrot.slane %v1677, 4
      %v1689 = vrot.slane %v1677, 6
      %v1690 = vrot.slane %v1678, 2
      %v1691 = vrot.slane %v1678, 4
      %v1692 = vrot.slane %v1678, 6
      %v1693 = vrot.slane %v1679, 2
      %v1694 = vrot.slane %v1679, 4
      %v1695 = vrot.slane %v1679, 6
      %v1696 = vrot.slane %v1680, 2
      %v1697 = vrot.slane %v1680, 4
      %v1698 = vrot.slane %v1680, 6
      %v1699 = vrot.slane %v1681, 2
      %1700 = vst [vmem:[#allocation1] ss:$4 sm:$0xff] %v1677
      %s1701 = scalar_lea.vmem [#allocation1], 1
      %1702 = vst [vmem:[%s1701] ss:$4 sm:$0xff] %v1687
      %s1703 = scalar_lea.vmem [#allocation1], 2
      %1704 = vst [vmem:[%s1703] ss:$4 sm:$0xff] %v1688
      %v1705 = vld.sshfl [vmem:[#allocation1] sm:$0xff pattern:$0x73625140]
      %s1706 = scalar_lea.vmem [#allocation1], 32
      %1707 = vst [vmem:[%s1706] ss:$4 sm:$0xff] %v1689
      %s1708 = scalar_lea.vmem [#allocation1], 33
      %1709 = vst [vmem:[%s1708] ss:$4 sm:$0xff] %v1678
      %s1710 = scalar_lea.vmem [#allocation1], 34
      %1711 = vst [vmem:[%s1710] ss:$4 sm:$0xff] %v1690
      %v1712 = vld.sshfl [vmem:[#allocation1 + $0x20] sm:$0xff pattern:$0x73625140]
      %1713 = vst [vmem:[#allocation1] ss:$4 sm:$0xff] %v1691
      %1714 = vst [vmem:[%s1701] ss:$4 sm:$0xff] %v1692
      %1715 = vst [vmem:[%s1703] ss:$4 sm:$0xff] %v1679
      %v1716 = vld.sshfl [vmem:[#allocation1] sm:$0xff pattern:$0x73625140]
      %1717 = vst [vmem:[%s1706] ss:$4 sm:$0xff] %v1693
      %1718 = vst [vmem:[%s1708] ss:$4 sm:$0xff] %v1694
      %1719 = vst [vmem:[%s1710] ss:$4 sm:$0xff] %v1695
      %v1720 = vld.sshfl [vmem:[#allocation1 + $0x20] sm:$0xff pattern:$0x73625140]
      %1721 = vst [vmem:[#allocation1] ss:$4 sm:$0xff] %v1680
      %1722 = vst [vmem:[%s1701] ss:$4 sm:$0xff] %v1696
      %1723 = vst [vmem:[%s1703] ss:$4 sm:$0xff] %v1697
      %v1724 = vld.sshfl [vmem:[#allocation1] sm:$0xff pattern:$0x73625140]
      %1725 = vst [vmem:[%s1706] ss:$4 sm:$0xff] %v1698
      %1726 = vst [vmem:[%s1708] ss:$4 sm:$0xff] %v1681
      %1727 = vst [vmem:[%s1710] ss:$4 sm:$0xff] %v1699
      %v1728 = vld.sshfl [vmem:[#allocation1 + $0x20] sm:$0xff pattern:$0x73625140]
      %s1735 = scalar_lea.vmem %s253, 8
      %vm1736 = vcmask 21504
      %1737 = vst.msk [vmem:[%s1735 + $0x1] sm:$0x3f] %vm1736, %v1705
      %1738 = vst.msk [vmem:[%s1735 + $0x9] sm:$0x3f] %vm1736, %v1712
      %1739 = vst.msk [vmem:[%s1735 + $0x11] sm:$0x3f] %vm1736, %v1716
      %1740 = vst.msk [vmem:[%s1735 + $0x19] sm:$0x3f] %vm1736, %v1720
      %1741 = vst.msk [vmem:[%s1735 + $0x21] sm:$0x3f] %vm1736, %v1724
      %1742 = vst.msk [vmem:[%s1735 + $0x29] sm:$0x3f] %vm1736, %v1728
      %p1743 = scmp.lt.s32.totalorder %s19, 1
      %s1744 = scalar_select %p1743, %s19, 1
      %s1745 = smul.addr %s1744, 8
      %s1746 = smul.addr %s1745, 8
      %s1747 = scalar_lea.vmem %s6, %s1746
      // Predicated region
      $region45: #{tpu_custom_call.1} parent=43 // pred_check
        %p1748 = pneg %p168
      $region46: #{tpu_custom_call.1} parent=43 // pred_check_branch
        %1750 = sbr.rel (%p1748) target = $region48
      $region47: #{tpu_custom_call.1} parent=43 // pred_region
        _
      $region48: #{tpu_custom_call.1} parent=43 // pred_fallthru
        _
    $region44: #{tpu_custom_call.1} parent=5 // pred_fallthru
      _
    %p1751 = scmp.le.s32.totalorder 2, %s14
    // Predicated region
    $region49: #{tpu_custom_call.1} parent=5 // pred_check
      %p1752 = pneg %p1751
    $region50: #{tpu_custom_call.1} parent=5 // pred_check_branch
      %1754 = sbr.rel (%p1752) target = $region52
    $region51: #{tpu_custom_call.1} parent=5 // pred_region
      %s1755 = ssub.s32 %s14, 2
      // Predicated region
      $region53: #{tpu_custom_call.1} parent=51 // pred_check
        %p1756 = pneg %p174
      $region54: #{tpu_custom_call.1} parent=51 // pred_check_branch
        %1758 = sbr.rel (%p1756) target = $region56
      $region55: #{tpu_custom_call.1} parent=51 // pred_region
        %p1759 = scmp.lt.s32.totalorder %s20, 1
        %s1760 = scalar_select %p1759, %s20, 1
        %s1761 = smul.addr %s1760, 8
        %s1762 = smul.addr %s1761, 8
        %s1763 = scalar_lea.vmem %s6, %s1762
      $region56: #{tpu_custom_call.1} parent=51 // pred_fallthru
        _
    $region52: #{tpu_custom_call.1} parent=5 // pred_fallthru
      _
  $region6: #{tpu_custom_call.1} parent=0 // loop_footer
    %s18 = sadd.s32 1, %s14
  $region7: #{tpu_custom_call.1} parent=0 // loop_footer_branch
    %13 = sbr.rel target = $region3
  $region8: #{tpu_custom_call.1} parent=0 // loop_exit
    _

</llo_original>
